<compile_context>
chip_gen: v5e
topology: v5e:2x2
jax: 0.10.0
libtpu: 0.0.40
codegen_flags: <defaults>
</compile_context>

<pallas_src>
import functools

import jax
import jax.numpy as jnp
from jax.experimental import pallas as pl
from jax.experimental.pallas import tpu as pltpu


# ----------------------------------------------------------------------------
# Fused kernel: per-(batch, channel-tile) grid step.
#   accumulate channel sum / max  ->  (last c step) 7x7 conv + sigmoid
# ----------------------------------------------------------------------------
def _spatial_attention_kernel(w_ref, cmask_ref, x_ref, o_ref,
                              sum_ref, max_ref, planes_ref,
                              *, ks, pad, W, HW, C, c_tile, pad_l):
    """Refs:
      w_ref      : SMEM (2*ks*ks,) f32 conv weights  [avg taps | max taps]
      cmask_ref  : VMEM (ks, HW)  f32 column-validity masks (one per iw)
      x_ref      : VMEM (1, c_tile, HW) f32, lane-dense channel tile of x
      o_ref      : VMEM (1, 1, HW) f32 attention map (written on last c step)
      sum_ref    : VMEM (1, HW) f32 running channel sum   (persists over c)
      max_ref    : VMEM (1, HW) f32 running channel max   (persists over c)
      planes_ref : VMEM (2, HW + 2*pad_l) f32 zero-padded flat [avg; max] planes
    """
    c_step = pl.program_id(1)
    n_c = pl.num_programs(1)

    # ---- init accumulators at the first channel step of every image --------
    @pl.when(c_step == 0)
    def _():
        sum_ref[...] = jnp.zeros_like(sum_ref)
        max_ref[...] = jnp.full_like(max_ref, -jnp.inf)

    # ---- fused single-pass channel sum + max over this channel tile --------
    # Chunk the tile (<=8 channels per chunk) to keep vreg live ranges bounded;
    # sum and max are produced from the same loaded chunk (one traversal).
    ragged = (C % c_tile) != 0
    for s in range(0, c_tile, 8):
        e = min(s + 8, c_tile)
        blk = x_ref[0, s:e, :]                               # (rows, HW)
        if ragged:
            ch = (c_step * c_tile + s
                  + jax.lax.broadcasted_iota(jnp.int32, blk.shape, 0))
            valid = ch < C
            blk_s = jnp.where(valid, blk, 0.0)
            blk_m = jnp.where(valid, blk, -jnp.inf)
        else:
            blk_s = blk
            blk_m = blk
        sum_ref[...] = sum_ref[...] + jnp.sum(blk_s, axis=0, keepdims=True)
        max_ref[...] = jnp.maximum(max_ref[...],
                                   jnp.max(blk_m, axis=0, keepdims=True))

    # ---- finalize: 7x7 conv over [avg|max] + sigmoid, last channel step -----
    @pl.when(c_step == n_c - 1)
    def _():
        # Zero-padded flat planes: row 0 = avg, row 1 = max.  The physical zero
        # border (pad_l >= pad*W + pad lanes on each side) realizes the conv's
        # zero padding for row-out-of-range taps; column wraparound of the flat
        # layout is removed by the per-iw column masks below.
        planes_ref[...] = jnp.zeros_like(planes_ref)
        planes_ref[0:1, pad_l:pad_l + HW] = sum_ref[...] * (1.0 / C)
        planes_ref[1:2, pad_l:pad_l + HW] = max_ref[...]

        # Unrolled 7x7 conv on the VPU.  Each window read serves BOTH planes
        # (they share vregs as 2 sublane rows).  acc_a / acc_m per iw plus the
        # two grand accumulators break the serial FMA chain (ILP).
        grand_a = jnp.zeros((2, HW), jnp.float32)
        grand_m = jnp.zeros((2, HW), jnp.float32)
        for iw in range(ks):
            dw = iw - pad
            acc_a = jnp.zeros((2, HW), jnp.float32)
            acc_m = jnp.zeros((2, HW), jnp.float32)
            for ih in range(ks):
                dh = ih - pad
                start = pad_l + dh * W + dw
                win = planes_ref[:, start:start + HW]        # (2, HW)
                acc_a = acc_a + w_ref[ih * ks + iw] * win
                acc_m = acc_m + w_ref[ks * ks + ih * ks + iw] * win
            cm = cmask_ref[iw:iw + 1, :]                     # (1, HW)
            grand_a = grand_a + acc_a * cm
            grand_m = grand_m + acc_m * cm

        # avg contribution lives in row 0 of grand_a, max in row 1 of grand_m.
        y = grand_a[0:1, :] + grand_m[1:2, :]                # (1, HW)
        o_ref[0] = jax.nn.sigmoid(y)                         # EUP epilogue


# ----------------------------------------------------------------------------
# Wrapper
# ----------------------------------------------------------------------------
def spatial_attention(x_nchw, conv_w, *, kernel_size=7):
    """x_nchw: (B, C, H, W) f32;  conv_w: (1, 2, ks, ks) OIHW (torch layout)."""
    assert kernel_size in (3, 7), "kernel size must be 3 or 7"
    pad = 3 if kernel_size == 7 else 1
    ks = kernel_size
    B, C, H, W = x_nchw.shape
    HW = H * W

    # Free, metadata-only reshapes (contiguous NCHW): lane-dense presentation.
    x_flat = x_nchw.astype(jnp.float32).reshape(B, C, HW)
    # (1, 2, ks, ks) -> flat (2*ks*ks,): [avg-plane taps | max-plane taps].
    w_flat = conv_w.astype(jnp.float32).reshape(2 * ks * ks)

    # Column-validity masks for the flattened conv (shape-only -> constant
    # folded by XLA, ~ks*HW*4 bytes).
    col = jnp.arange(HW, dtype=jnp.int32) % W
    colmask = jnp.stack(
        [((col + (iw - pad) >= 0) & (col + (iw - pad) < W)).astype(jnp.float32)
         for iw in range(ks)], axis=0)                       # (ks, HW)

    # Channel tile: whole C when small, else a multiple of 8 sized to ~1 MiB
    # per (double-buffered) input block so DMA overlaps compute and VMEM stays
    # bounded on v5e (16 MiB scoped) / v7x (64 MiB physical).
    max_block_elems = max(8, (1 * 1024 * 1024) // (4 * HW))
    if C <= max_block_elems:
        c_tile = C
    else:
        c_tile = max(8, (max_block_elems // 8) * 8)
    n_ct = pl.cdiv(C, c_tile)

    # Left/right physical zero pad of the flat planes (>= pad*W + pad, rounded
    # up to 128 lanes so the interior store is vreg-aligned).
    pad_l = ((pad * W + pad + 127) // 128) * 128
    flat_len = HW + 2 * pad_l

    kernel = functools.partial(
        _spatial_attention_kernel,
        ks=ks, pad=pad, W=W, HW=HW, C=C, c_tile=c_tile, pad_l=pad_l)

    # Real HBM traffic / work (un-padded input, single output map).
    flops = B * (2 * C * HW + 4 * ks * ks * HW)
    bytes_accessed = 4 * (B * C * HW + B * HW + 2 * ks * ks + ks * HW)

    # VMEM budget from the actual block / scratch sizes (+ headroom).
    block_bytes = 4 * (2 * c_tile * HW      # x block, double-buffered
                       + 2 * ks * HW        # column masks, double-buffered
                       + 2 * HW             # output block, double-buffered
                       + 2 * HW             # sum / max accumulators
                       + 2 * flat_len)      # padded flat planes
    vmem_limit = int(min(96 * 1024 * 1024, max(8 * 1024 * 1024, 3 * block_bytes)))

    out = pl.pallas_call(
        kernel,
        out_shape=jax.ShapeDtypeStruct((B, 1, HW), jnp.float32),
        grid=(B, n_ct),
        in_specs=[
            # 98 scalar weights in SMEM (scalar reads, broadcast to the VPU).
            pl.BlockSpec(memory_space=pltpu.MemorySpace.SMEM),
            # Column masks: tiny, constant across the grid.
            pl.BlockSpec((ks, HW), lambda b, c: (0, 0)),
            # One lane-dense channel tile of one image per grid step.
            pl.BlockSpec((1, c_tile, HW), lambda b, c: (b, c, 0)),
        ],
        out_specs=pl.BlockSpec((1, 1, HW), lambda b, c: (b, 0, 0)),
        scratch_shapes=[
            pltpu.VMEM((1, HW), jnp.float32),        # channel-sum accumulator
            pltpu.VMEM((1, HW), jnp.float32),        # channel-max accumulator
            pltpu.VMEM((2, flat_len), jnp.float32),  # zero-padded [avg; max]
        ],
        compiler_params=pltpu.CompilerParams(
            dimension_semantics=("parallel", "arbitrary"),
            vmem_limit_bytes=vmem_limit),
        cost_estimate=pl.CostEstimate(
            flops=flops,
            transcendentals=B * HW,
            bytes_accessed=bytes_accessed),
    )(w_flat, colmask, x_flat)

    return out.reshape(B, 1, H, W)     # free metadata reshape


# ----------------------------------------------------------------------------
# Pure-JAX reference (mirrors the PyTorch module) for a correctness check
# ----------------------------------------------------------------------------
def spatial_attention_reference(x_nchw, conv_w, kernel_size=7):
    pad = 3 if kernel_size == 7 else 1
    avg = jnp.mean(x_nchw, axis=1, keepdims=True)
    mx = jnp.max(x_nchw, axis=1, keepdims=True)
    cat = jnp.concatenate([avg, mx], axis=1)
    y = jax.lax.conv_general_dilated(
        cat, conv_w, window_strides=(1, 1),
        padding=[(pad, pad), (pad, pad)],
        dimension_numbers=("NCHW", "OIHW", "NCHW"))
    return jax.nn.sigmoid(y)


# ----------------------------------------------------------------------------
if __name__ == "__main__":
    key = jax.random.PRNGKey(0)
    k_w, k_x = jax.random.split(key)

    batch, channels, height, width = 2, 4, 16, 16
    kernel_size = 7

    # Conv2d(2, 1, 7, padding=3, bias=False) weight, OIHW like torch.
    fan_in = 2 * kernel_size * kernel_size
    bound = 1.0 / (fan_in ** 0.5)
    conv_w = jax.random.uniform(k_w, (1, 2, kernel_size, kernel_size),
                                jnp.float32, -bound, bound)

    x = jax.random.normal(k_x, (batch, channels, height, width), jnp.float32)

    fwd = jax.jit(functools.partial(spatial_attention, kernel_size=kernel_size))
    out = fwd(x, conv_w)
    jax.block_until_ready(out)

    assert out.shape == (batch, 1, height, width), out.shape
    assert bool(jnp.all(jnp.isfinite(out)))
    assert bool(jnp.all((out >= 0.0) & (out <= 1.0)))

    ref = spatial_attention_reference(x, conv_w, kernel_size)
    assert bool(jnp.allclose(out, ref, atol=1e-5, rtol=1e-5)), (
        float(jnp.max(jnp.abs(out - ref))))

    print("KERNEL_OK")
</pallas_src>

<mosaic_0001>
module attributes {stable_mosaic.version = 11 : i64} {
  func.func @_spatial_attention_kernel(%arg0: i32, %arg1: i32, %arg2: memref<98xf32, #tpu.memory_space<smem>>, %arg3: memref<7x256xf32, #tpu.memory_space<vmem>>, %arg4: memref<1x4x256xf32, #tpu.memory_space<vmem>>, %arg5: memref<1x1x256xf32, #tpu.memory_space<vmem>>, %arg6: memref<1x256xf32, #tpu.memory_space<vmem>>, %arg7: memref<1x256xf32, #tpu.memory_space<vmem>>, %arg8: memref<2x512xf32, #tpu.memory_space<vmem>>) attributes {dimension_semantics = [#tpu.dimension_semantics<parallel>, #tpu.dimension_semantics<arbitrary>], iteration_bounds = array<i64: 2, 1>, scalar_prefetch = 0 : i64, scratch_operands = 3 : i64, tpu.core_type = #tpu.core_type<tc>, window_params = [{transform_indices = @transform_0, window_bounds = array<i64: 98>}, {pipeline_mode = #tpu.pipeline_mode<synchronous>, transform_indices = @transform_1, window_bounds = array<i64: 7, 256>}, {transform_indices = @transform_2, window_bounds = array<i64: 1, 4, 256>}, {transform_indices = @transform_3, window_bounds = array<i64: 1, 1, 256>}]} {
    %c0_i32 = arith.constant 0 : i32
    %0 = arith.cmpi eq, %arg1, %c0_i32 : i32
    %1 = arith.extui %0 : i1 to i32
    %c0_i32_0 = arith.constant 0 : i32
    %2 = arith.cmpi ne, %1, %c0_i32_0 : i32
    scf.if %2 {
      %cst_14 = arith.constant 0.000000e+00 : f32
      %18 = vector.broadcast %cst_14 : f32 to vector<1x256xf32>
      %c0_15 = arith.constant 0 : index
      %c0_16 = arith.constant 0 : index
      %19 = vector.load %arg6[%c0_15, %c0_16] : memref<1x256xf32, #tpu.memory_space<vmem>>, vector<1x256xf32>
      tpu.vector_store %arg6[%c0_15, %c0_16], %18 {strides = array<i32>} : memref<1x256xf32, #tpu.memory_space<vmem>>, vector<1x256xf32>,
      %cst_17 = arith.constant 0xFF800000 : f32
      %20 = vector.broadcast %cst_17 : f32 to vector<1x256xf32>
      %c0_18 = arith.constant 0 : index
      %c0_19 = arith.constant 0 : index
      %21 = vector.load %arg7[%c0_18, %c0_19] : memref<1x256xf32, #tpu.memory_space<vmem>>, vector<1x256xf32>
      tpu.vector_store %arg7[%c0_18, %c0_19], %20 {strides = array<i32>} : memref<1x256xf32, #tpu.memory_space<vmem>>, vector<1x256xf32>,
    } else {
    }
    %c0 = arith.constant 0 : index
    %c0_1 = arith.constant 0 : index
    %c0_2 = arith.constant 0 : index
    %3 = vector.load %arg4[%c0, %c0_1, %c0_2] : memref<1x4x256xf32, #tpu.memory_space<vmem>>, vector<1x4x256xf32>
    %4 = vector.shape_cast %3 : vector<1x4x256xf32> to vector<4x256xf32>
    %c0_3 = arith.constant 0 : index
    %c0_4 = arith.constant 0 : index
    %5 = vector.load %arg6[%c0_3, %c0_4] : memref<1x256xf32, #tpu.memory_space<vmem>>, vector<1x256xf32>
    %cst = arith.constant dense<0.000000e+00> : vector<256xf32>
    %6 = vector.multi_reduction <add>, %4, %cst [0] : vector<4x256xf32> to vector<256xf32>
    %7 = vector.shape_cast %6 : vector<256xf32> to vector<1x256xf32>
    %8 = arith.addf %5, %7 : vector<1x256xf32>
    %c0_5 = arith.constant 0 : index
    %c0_6 = arith.constant 0 : index
    %9 = vector.load %arg6[%c0_5, %c0_6] : memref<1x256xf32, #tpu.memory_space<vmem>>, vector<1x256xf32>
    tpu.vector_store %arg6[%c0_5, %c0_6], %8 {strides = array<i32>} : memref<1x256xf32, #tpu.memory_space<vmem>>, vector<1x256xf32>,
    %c0_7 = arith.constant 0 : index
    %c0_8 = arith.constant 0 : index
    %10 = vector.load %arg7[%c0_7, %c0_8] : memref<1x256xf32, #tpu.memory_space<vmem>>, vector<1x256xf32>
    %cst_9 = arith.constant dense<0xFF800000> : vector<256xf32>
    %11 = vector.multi_reduction <maximumf>, %4, %cst_9 [0] : vector<4x256xf32> to vector<256xf32>
    %12 = vector.shape_cast %11 : vector<256xf32> to vector<1x256xf32>
    %13 = arith.maximumf %10, %12 : vector<1x256xf32>
    %c0_10 = arith.constant 0 : index
    %c0_11 = arith.constant 0 : index
    %14 = vector.load %arg7[%c0_10, %c0_11] : memref<1x256xf32, #tpu.memory_space<vmem>>, vector<1x256xf32>
    tpu.vector_store %arg7[%c0_10, %c0_11], %13 {strides = array<i32>} : memref<1x256xf32, #tpu.memory_space<vmem>>, vector<1x256xf32>,
    %c0_i32_12 = arith.constant 0 : i32
    %15 = arith.cmpi eq, %arg1, %c0_i32_12 : i32
    %16 = arith.extui %15 : i1 to i32
    %c0_i32_13 = arith.constant 0 : i32
    %17 = arith.cmpi ne, %16, %c0_i32_13 : i32
    scf.if %17 {
      %cst_14 = arith.constant 0.000000e+00 : f32
      %18 = vector.broadcast %cst_14 : f32 to vector<2x512xf32>
      %c0_15 = arith.constant 0 : index
      %c0_16 = arith.constant 0 : index
      %19 = vector.load %arg8[%c0_15, %c0_16] : memref<2x512xf32, #tpu.memory_space<vmem>>, vector<2x512xf32>
      tpu.vector_store %arg8[%c0_15, %c0_16], %18 {strides = array<i32>} : memref<2x512xf32, #tpu.memory_space<vmem>>, vector<2x512xf32>,
      %c0_17 = arith.constant 0 : index
      %c0_18 = arith.constant 0 : index
      %20 = vector.load %arg6[%c0_17, %c0_18] : memref<1x256xf32, #tpu.memory_space<vmem>>, vector<1x256xf32>
      %cst_19 = arith.constant 2.500000e-01 : f32
      %21 = vector.broadcast %cst_19 : f32 to vector<1x256xf32>
      %22 = arith.mulf %20, %21 : vector<1x256xf32>
      %c0_20 = arith.constant 0 : index
      %c128 = arith.constant 128 : index
      %23 = vector.load %arg8[%c0_20, %c128] : memref<2x512xf32, #tpu.memory_space<vmem>>, vector<1x256xf32>
      tpu.vector_store %arg8[%c0_20, %c128], %22 {strides = array<i32>} : memref<2x512xf32, #tpu.memory_space<vmem>>, vector<1x256xf32>,
      %c0_21 = arith.constant 0 : index
      %c0_22 = arith.constant 0 : index
      %24 = vector.load %arg7[%c0_21, %c0_22] : memref<1x256xf32, #tpu.memory_space<vmem>>, vector<1x256xf32>
      %c1 = arith.constant 1 : index
      %c128_23 = arith.constant 128 : index
      %25 = vector.load %arg8[%c1, %c128_23] : memref<2x512xf32, #tpu.memory_space<vmem>>, vector<1x256xf32>
      tpu.vector_store %arg8[%c1, %c128_23], %24 {strides = array<i32>} : memref<2x512xf32, #tpu.memory_space<vmem>>, vector<1x256xf32>,
      %cst_24 = arith.constant 0.000000e+00 : f32
      %26 = vector.broadcast %cst_24 : f32 to vector<2x256xf32>
      %cst_25 = arith.constant 0.000000e+00 : f32
      %27 = vector.broadcast %cst_25 : f32 to vector<2x256xf32>
      %cst_26 = arith.constant 0.000000e+00 : f32
      %28 = vector.broadcast %cst_26 : f32 to vector<2x256xf32>
      %cst_27 = arith.constant 0.000000e+00 : f32
      %29 = vector.broadcast %cst_27 : f32 to vector<2x256xf32>
      %c0_28 = arith.constant 0 : index
      %c77 = arith.constant 77 : index
      %30 = vector.load %arg8[%c0_28, %c77] : memref<2x512xf32, #tpu.memory_space<vmem>>, vector<2x256xf32>
      %c0_29 = arith.constant 0 : index
      %31 = memref.load %arg2[%c0_29] : memref<98xf32, #tpu.memory_space<smem>>
      %32 = vector.broadcast %31 : f32 to vector<2x256xf32>
      %33 = arith.mulf %32, %30 : vector<2x256xf32>
      %34 = arith.addf %28, %33 : vector<2x256xf32>
      %c49 = arith.constant 49 : index
      %35 = memref.load %arg2[%c49] : memref<98xf32, #tpu.memory_space<smem>>
      %36 = vector.broadcast %35 : f32 to vector<2x256xf32>
      %37 = arith.mulf %36, %30 : vector<2x256xf32>
      %38 = arith.addf %29, %37 : vector<2x256xf32>
      %c0_30 = arith.constant 0 : index
      %c93 = arith.constant 93 : index
      %39 = vector.load %arg8[%c0_30, %c93] : memref<2x512xf32, #tpu.memory_space<vmem>>, vector<2x256xf32>
      %c7 = arith.constant 7 : index
      %40 = memref.load %arg2[%c7] : memref<98xf32, #tpu.memory_space<smem>>
      %41 = vector.broadcast %40 : f32 to vector<2x256xf32>
      %42 = arith.mulf %41, %39 : vector<2x256xf32>
      %43 = arith.addf %34, %42 : vector<2x256xf32>
      %c56 = arith.constant 56 : index
      %44 = memref.load %arg2[%c56] : memref<98xf32, #tpu.memory_space<smem>>
      %45 = vector.broadcast %44 : f32 to vector<2x256xf32>
      %46 = arith.mulf %45, %39 : vector<2x256xf32>
      %47 = arith.addf %38, %46 : vector<2x256xf32>
      %c0_31 = arith.constant 0 : index
      %c109 = arith.constant 109 : index
      %48 = vector.load %arg8[%c0_31, %c109] : memref<2x512xf32, #tpu.memory_space<vmem>>, vector<2x256xf32>
      %c14 = arith.constant 14 : index
      %49 = memref.load %arg2[%c14] : memref<98xf32, #tpu.memory_space<smem>>
      %50 = vector.broadcast %49 : f32 to vector<2x256xf32>
      %51 = arith.mulf %50, %48 : vector<2x256xf32>
      %52 = arith.addf %43, %51 : vector<2x256xf32>
      %c63 = arith.constant 63 : index
      %53 = memref.load %arg2[%c63] : memref<98xf32, #tpu.memory_space<smem>>
      %54 = vector.broadcast %53 : f32 to vector<2x256xf32>
      %55 = arith.mulf %54, %48 : vector<2x256xf32>
      %56 = arith.addf %47, %55 : vector<2x256xf32>
      %c0_32 = arith.constant 0 : index
      %c125 = arith.constant 125 : index
      %57 = vector.load %arg8[%c0_32, %c125] : memref<2x512xf32, #tpu.memory_space<vmem>>, vector<2x256xf32>
      %c21 = arith.constant 21 : index
      %58 = memref.load %arg2[%c21] : memref<98xf32, #tpu.memory_space<smem>>
      %59 = vector.broadcast %58 : f32 to vector<2x256xf32>
      %60 = arith.mulf %59, %57 : vector<2x256xf32>
      %61 = arith.addf %52, %60 : vector<2x256xf32>
      %c70 = arith.constant 70 : index
      %62 = memref.load %arg2[%c70] : memref<98xf32, #tpu.memory_space<smem>>
      %63 = vector.broadcast %62 : f32 to vector<2x256xf32>
      %64 = arith.mulf %63, %57 : vector<2x256xf32>
      %65 = arith.addf %56, %64 : vector<2x256xf32>
      %c0_33 = arith.constant 0 : index
      %c141 = arith.constant 141 : index
      %66 = vector.load %arg8[%c0_33, %c141] : memref<2x512xf32, #tpu.memory_space<vmem>>, vector<2x256xf32>
      %c28 = arith.constant 28 : index
      %67 = memref.load %arg2[%c28] : memref<98xf32, #tpu.memory_space<smem>>
      %68 = vector.broadcast %67 : f32 to vector<2x256xf32>
      %69 = arith.mulf %68, %66 : vector<2x256xf32>
      %70 = arith.addf %61, %69 : vector<2x256xf32>
      %c77_34 = arith.constant 77 : index
      %71 = memref.load %arg2[%c77_34] : memref<98xf32, #tpu.memory_space<smem>>
      %72 = vector.broadcast %71 : f32 to vector<2x256xf32>
      %73 = arith.mulf %72, %66 : vector<2x256xf32>
      %74 = arith.addf %65, %73 : vector<2x256xf32>
      %c0_35 = arith.constant 0 : index
      %c157 = arith.constant 157 : index
      %75 = vector.load %arg8[%c0_35, %c157] : memref<2x512xf32, #tpu.memory_space<vmem>>, vector<2x256xf32>
      %c35 = arith.constant 35 : index
      %76 = memref.load %arg2[%c35] : memref<98xf32, #tpu.memory_space<smem>>
      %77 = vector.broadcast %76 : f32 to vector<2x256xf32>
      %78 = arith.mulf %77, %75 : vector<2x256xf32>
      %79 = arith.addf %70, %78 : vector<2x256xf32>
      %c84 = arith.constant 84 : index
      %80 = memref.load %arg2[%c84] : memref<98xf32, #tpu.memory_space<smem>>
      %81 = vector.broadcast %80 : f32 to vector<2x256xf32>
      %82 = arith.mulf %81, %75 : vector<2x256xf32>
      %83 = arith.addf %74, %82 : vector<2x256xf32>
      %c0_36 = arith.constant 0 : index
      %c173 = arith.constant 173 : index
      %84 = vector.load %arg8[%c0_36, %c173] : memref<2x512xf32, #tpu.memory_space<vmem>>, vector<2x256xf32>
      %c42 = arith.constant 42 : index
      %85 = memref.load %arg2[%c42] : memref<98xf32, #tpu.memory_space<smem>>
      %86 = vector.broadcast %85 : f32 to vector<2x256xf32>
      %87 = arith.mulf %86, %84 : vector<2x256xf32>
      %88 = arith.addf %79, %87 : vector<2x256xf32>
      %c91 = arith.constant 91 : index
      %89 = memref.load %arg2[%c91] : memref<98xf32, #tpu.memory_space<smem>>
      %90 = vector.broadcast %89 : f32 to vector<2x256xf32>
      %91 = arith.mulf %90, %84 : vector<2x256xf32>
      %92 = arith.addf %83, %91 : vector<2x256xf32>
      %c0_37 = arith.constant 0 : index
      %c0_38 = arith.constant 0 : index
      %93 = vector.load %arg3[%c0_37, %c0_38] : memref<7x256xf32, #tpu.memory_space<vmem>>, vector<1x256xf32>
      %94 = vector.broadcast %93 : vector<1x256xf32> to vector<2x256xf32>
      %95 = arith.mulf %88, %94 : vector<2x256xf32>
      %96 = arith.addf %26, %95 : vector<2x256xf32>
      %97 = vector.broadcast %93 : vector<1x256xf32> to vector<2x256xf32>
      %98 = arith.mulf %92, %97 : vector<2x256xf32>
      %99 = arith.addf %27, %98 : vector<2x256xf32>
      %cst_39 = arith.constant 0.000000e+00 : f32
      %100 = vector.broadcast %cst_39 : f32 to vector<2x256xf32>
      %cst_40 = arith.constant 0.000000e+00 : f32
      %101 = vector.broadcast %cst_40 : f32 to vector<2x256xf32>
      %c0_41 = arith.constant 0 : index
      %c78 = arith.constant 78 : index
      %102 = vector.load %arg8[%c0_41, %c78] : memref<2x512xf32, #tpu.memory_space<vmem>>, vector<2x256xf32>
      %c1_42 = arith.constant 1 : index
      %103 = memref.load %arg2[%c1_42] : memref<98xf32, #tpu.memory_space<smem>>
      %104 = vector.broadcast %103 : f32 to vector<2x256xf32>
      %105 = arith.mulf %104, %102 : vector<2x256xf32>
      %106 = arith.addf %100, %105 : vector<2x256xf32>
      %c50 = arith.constant 50 : index
      %107 = memref.load %arg2[%c50] : memref<98xf32, #tpu.memory_space<smem>>
      %108 = vector.broadcast %107 : f32 to vector<2x256xf32>
      %109 = arith.mulf %108, %102 : vector<2x256xf32>
      %110 = arith.addf %101, %109 : vector<2x256xf32>
      %c0_43 = arith.constant 0 : index
      %c94 = arith.constant 94 : index
      %111 = vector.load %arg8[%c0_43, %c94] : memref<2x512xf32, #tpu.memory_space<vmem>>, vector<2x256xf32>
      %c8 = arith.constant 8 : index
      %112 = memref.load %arg2[%c8] : memref<98xf32, #tpu.memory_space<smem>>
      %113 = vector.broadcast %112 : f32 to vector<2x256xf32>
      %114 = arith.mulf %113, %111 : vector<2x256xf32>
      %115 = arith.addf %106, %114 : vector<2x256xf32>
      %c57 = arith.constant 57 : index
      %116 = memref.load %arg2[%c57] : memref<98xf32, #tpu.memory_space<smem>>
      %117 = vector.broadcast %116 : f32 to vector<2x256xf32>
      %118 = arith.mulf %117, %111 : vector<2x256xf32>
      %119 = arith.addf %110, %118 : vector<2x256xf32>
      %c0_44 = arith.constant 0 : index
      %c110 = arith.constant 110 : index
      %120 = vector.load %arg8[%c0_44, %c110] : memref<2x512xf32, #tpu.memory_space<vmem>>, vector<2x256xf32>
      %c15 = arith.constant 15 : index
      %121 = memref.load %arg2[%c15] : memref<98xf32, #tpu.memory_space<smem>>
      %122 = vector.broadcast %121 : f32 to vector<2x256xf32>
      %123 = arith.mulf %122, %120 : vector<2x256xf32>
      %124 = arith.addf %115, %123 : vector<2x256xf32>
      %c64 = arith.constant 64 : index
      %125 = memref.load %arg2[%c64] : memref<98xf32, #tpu.memory_space<smem>>
      %126 = vector.broadcast %125 : f32 to vector<2x256xf32>
      %127 = arith.mulf %126, %120 : vector<2x256xf32>
      %128 = arith.addf %119, %127 : vector<2x256xf32>
      %c0_45 = arith.constant 0 : index
      %c126 = arith.constant 126 : index
      %129 = vector.load %arg8[%c0_45, %c126] : memref<2x512xf32, #tpu.memory_space<vmem>>, vector<2x256xf32>
      %c22 = arith.constant 22 : index
      %130 = memref.load %arg2[%c22] : memref<98xf32, #tpu.memory_space<smem>>
      %131 = vector.broadcast %130 : f32 to vector<2x256xf32>
      %132 = arith.mulf %131, %129 : vector<2x256xf32>
      %133 = arith.addf %124, %132 : vector<2x256xf32>
      %c71 = arith.constant 71 : index
      %134 = memref.load %arg2[%c71] : memref<98xf32, #tpu.memory_space<smem>>
      %135 = vector.broadcast %134 : f32 to vector<2x256xf32>
      %136 = arith.mulf %135, %129 : vector<2x256xf32>
      %137 = arith.addf %128, %136 : vector<2x256xf32>
      %c0_46 = arith.constant 0 : index
      %c142 = arith.constant 142 : index
      %138 = vector.load %arg8[%c0_46, %c142] : memref<2x512xf32, #tpu.memory_space<vmem>>, vector<2x256xf32>
      %c29 = arith.constant 29 : index
      %139 = memref.load %arg2[%c29] : memref<98xf32, #tpu.memory_space<smem>>
      %140 = vector.broadcast %139 : f32 to vector<2x256xf32>
      %141 = arith.mulf %140, %138 : vector<2x256xf32>
      %142 = arith.addf %133, %141 : vector<2x256xf32>
      %c78_47 = arith.constant 78 : index
      %143 = memref.load %arg2[%c78_47] : memref<98xf32, #tpu.memory_space<smem>>
      %144 = vector.broadcast %143 : f32 to vector<2x256xf32>
      %145 = arith.mulf %144, %138 : vector<2x256xf32>
      %146 = arith.addf %137, %145 : vector<2x256xf32>
      %c0_48 = arith.constant 0 : index
      %c158 = arith.constant 158 : index
      %147 = vector.load %arg8[%c0_48, %c158] : memref<2x512xf32, #tpu.memory_space<vmem>>, vector<2x256xf32>
      %c36 = arith.constant 36 : index
      %148 = memref.load %arg2[%c36] : memref<98xf32, #tpu.memory_space<smem>>
      %149 = vector.broadcast %148 : f32 to vector<2x256xf32>
      %150 = arith.mulf %149, %147 : vector<2x256xf32>
      %151 = arith.addf %142, %150 : vector<2x256xf32>
      %c85 = arith.constant 85 : index
      %152 = memref.load %arg2[%c85] : memref<98xf32, #tpu.memory_space<smem>>
      %153 = vector.broadcast %152 : f32 to vector<2x256xf32>
      %154 = arith.mulf %153, %147 : vector<2x256xf32>
      %155 = arith.addf %146, %154 : vector<2x256xf32>
      %c0_49 = arith.constant 0 : index
      %c174 = arith.constant 174 : index
      %156 = vector.load %arg8[%c0_49, %c174] : memref<2x512xf32, #tpu.memory_space<vmem>>, vector<2x256xf32>
      %c43 = arith.constant 43 : index
      %157 = memref.load %arg2[%c43] : memref<98xf32, #tpu.memory_space<smem>>
      %158 = vector.broadcast %157 : f32 to vector<2x256xf32>
      %159 = arith.mulf %158, %156 : vector<2x256xf32>
      %160 = arith.addf %151, %159 : vector<2x256xf32>
      %c92 = arith.constant 92 : index
      %161 = memref.load %arg2[%c92] : memref<98xf32, #tpu.memory_space<smem>>
      %162 = vector.broadcast %161 : f32 to vector<2x256xf32>
      %163 = arith.mulf %162, %156 : vector<2x256xf32>
      %164 = arith.addf %155, %163 : vector<2x256xf32>
      %c1_50 = arith.constant 1 : index
      %c0_51 = arith.constant 0 : index
      %165 = vector.load %arg3[%c1_50, %c0_51] : memref<7x256xf32, #tpu.memory_space<vmem>>, vector<1x256xf32>
      %166 = vector.broadcast %165 : vector<1x256xf32> to vector<2x256xf32>
      %167 = arith.mulf %160, %166 : vector<2x256xf32>
      %168 = arith.addf %96, %167 : vector<2x256xf32>
      %169 = vector.broadcast %165 : vector<1x256xf32> to vector<2x256xf32>
      %170 = arith.mulf %164, %169 : vector<2x256xf32>
      %171 = arith.addf %99, %170 : vector<2x256xf32>
      %cst_52 = arith.constant 0.000000e+00 : f32
      %172 = vector.broadcast %cst_52 : f32 to vector<2x256xf32>
      %cst_53 = arith.constant 0.000000e+00 : f32
      %173 = vector.broadcast %cst_53 : f32 to vector<2x256xf32>
      %c0_54 = arith.constant 0 : index
      %c79 = arith.constant 79 : index
      %174 = vector.load %arg8[%c0_54, %c79] : memref<2x512xf32, #tpu.memory_space<vmem>>, vector<2x256xf32>
      %c2 = arith.constant 2 : index
      %175 = memref.load %arg2[%c2] : memref<98xf32, #tpu.memory_space<smem>>
      %176 = vector.broadcast %175 : f32 to vector<2x256xf32>
      %177 = arith.mulf %176, %174 : vector<2x256xf32>
      %178 = arith.addf %172, %177 : vector<2x256xf32>
      %c51 = arith.constant 51 : index
      %179 = memref.load %arg2[%c51] : memref<98xf32, #tpu.memory_space<smem>>
      %180 = vector.broadcast %179 : f32 to vector<2x256xf32>
      %181 = arith.mulf %180, %174 : vector<2x256xf32>
      %182 = arith.addf %173, %181 : vector<2x256xf32>
      %c0_55 = arith.constant 0 : index
      %c95 = arith.constant 95 : index
      %183 = vector.load %arg8[%c0_55, %c95] : memref<2x512xf32, #tpu.memory_space<vmem>>, vector<2x256xf32>
      %c9 = arith.constant 9 : index
      %184 = memref.load %arg2[%c9] : memref<98xf32, #tpu.memory_space<smem>>
      %185 = vector.broadcast %184 : f32 to vector<2x256xf32>
      %186 = arith.mulf %185, %183 : vector<2x256xf32>
      %187 = arith.addf %178, %186 : vector<2x256xf32>
      %c58 = arith.constant 58 : index
      %188 = memref.load %arg2[%c58] : memref<98xf32, #tpu.memory_space<smem>>
      %189 = vector.broadcast %188 : f32 to vector<2x256xf32>
      %190 = arith.mulf %189, %183 : vector<2x256xf32>
      %191 = arith.addf %182, %190 : vector<2x256xf32>
      %c0_56 = arith.constant 0 : index
      %c111 = arith.constant 111 : index
      %192 = vector.load %arg8[%c0_56, %c111] : memref<2x512xf32, #tpu.memory_space<vmem>>, vector<2x256xf32>
      %c16 = arith.constant 16 : index
      %193 = memref.load %arg2[%c16] : memref<98xf32, #tpu.memory_space<smem>>
      %194 = vector.broadcast %193 : f32 to vector<2x256xf32>
      %195 = arith.mulf %194, %192 : vector<2x256xf32>
      %196 = arith.addf %187, %195 : vector<2x256xf32>
      %c65 = arith.constant 65 : index
      %197 = memref.load %arg2[%c65] : memref<98xf32, #tpu.memory_space<smem>>
      %198 = vector.broadcast %197 : f32 to vector<2x256xf32>
      %199 = arith.mulf %198, %192 : vector<2x256xf32>
      %200 = arith.addf %191, %199 : vector<2x256xf32>
      %c0_57 = arith.constant 0 : index
      %c127 = arith.constant 127 : index
      %201 = vector.load %arg8[%c0_57, %c127] : memref<2x512xf32, #tpu.memory_space<vmem>>, vector<2x256xf32>
      %c23 = arith.constant 23 : index
      %202 = memref.load %arg2[%c23] : memref<98xf32, #tpu.memory_space<smem>>
      %203 = vector.broadcast %202 : f32 to vector<2x256xf32>
      %204 = arith.mulf %203, %201 : vector<2x256xf32>
      %205 = arith.addf %196, %204 : vector<2x256xf32>
      %c72 = arith.constant 72 : index
      %206 = memref.load %arg2[%c72] : memref<98xf32, #tpu.memory_space<smem>>
      %207 = vector.broadcast %206 : f32 to vector<2x256xf32>
      %208 = arith.mulf %207, %201 : vector<2x256xf32>
      %209 = arith.addf %200, %208 : vector<2x256xf32>
      %c0_58 = arith.constant 0 : index
      %c143 = arith.constant 143 : index
      %210 = vector.load %arg8[%c0_58, %c143] : memref<2x512xf32, #tpu.memory_space<vmem>>, vector<2x256xf32>
      %c30 = arith.constant 30 : index
      %211 = memref.load %arg2[%c30] : memref<98xf32, #tpu.memory_space<smem>>
      %212 = vector.broadcast %211 : f32 to vector<2x256xf32>
      %213 = arith.mulf %212, %210 : vector<2x256xf32>
      %214 = arith.addf %205, %213 : vector<2x256xf32>
      %c79_59 = arith.constant 79 : index
      %215 = memref.load %arg2[%c79_59] : memref<98xf32, #tpu.memory_space<smem>>
      %216 = vector.broadcast %215 : f32 to vector<2x256xf32>
      %217 = arith.mulf %216, %210 : vector<2x256xf32>
      %218 = arith.addf %209, %217 : vector<2x256xf32>
      %c0_60 = arith.constant 0 : index
      %c159 = arith.constant 159 : index
      %219 = vector.load %arg8[%c0_60, %c159] : memref<2x512xf32, #tpu.memory_space<vmem>>, vector<2x256xf32>
      %c37 = arith.constant 37 : index
      %220 = memref.load %arg2[%c37] : memref<98xf32, #tpu.memory_space<smem>>
      %221 = vector.broadcast %220 : f32 to vector<2x256xf32>
      %222 = arith.mulf %221, %219 : vector<2x256xf32>
      %223 = arith.addf %214, %222 : vector<2x256xf32>
      %c86 = arith.constant 86 : index
      %224 = memref.load %arg2[%c86] : memref<98xf32, #tpu.memory_space<smem>>
      %225 = vector.broadcast %224 : f32 to vector<2x256xf32>
      %226 = arith.mulf %225, %219 : vector<2x256xf32>
      %227 = arith.addf %218, %226 : vector<2x256xf32>
      %c0_61 = arith.constant 0 : index
      %c175 = arith.constant 175 : index
      %228 = vector.load %arg8[%c0_61, %c175] : memref<2x512xf32, #tpu.memory_space<vmem>>, vector<2x256xf32>
      %c44 = arith.constant 44 : index
      %229 = memref.load %arg2[%c44] : memref<98xf32, #tpu.memory_space<smem>>
      %230 = vector.broadcast %229 : f32 to vector<2x256xf32>
      %231 = arith.mulf %230, %228 : vector<2x256xf32>
      %232 = arith.addf %223, %231 : vector<2x256xf32>
      %c93_62 = arith.constant 93 : index
      %233 = memref.load %arg2[%c93_62] : memref<98xf32, #tpu.memory_space<smem>>
      %234 = vector.broadcast %233 : f32 to vector<2x256xf32>
      %235 = arith.mulf %234, %228 : vector<2x256xf32>
      %236 = arith.addf %227, %235 : vector<2x256xf32>
      %c2_63 = arith.constant 2 : index
      %c0_64 = arith.constant 0 : index
      %237 = vector.load %arg3[%c2_63, %c0_64] : memref<7x256xf32, #tpu.memory_space<vmem>>, vector<1x256xf32>
      %238 = vector.broadcast %237 : vector<1x256xf32> to vector<2x256xf32>
      %239 = arith.mulf %232, %238 : vector<2x256xf32>
      %240 = arith.addf %168, %239 : vector<2x256xf32>
      %241 = vector.broadcast %237 : vector<1x256xf32> to vector<2x256xf32>
      %242 = arith.mulf %236, %241 : vector<2x256xf32>
      %243 = arith.addf %171, %242 : vector<2x256xf32>
      %cst_65 = arith.constant 0.000000e+00 : f32
      %244 = vector.broadcast %cst_65 : f32 to vector<2x256xf32>
      %cst_66 = arith.constant 0.000000e+00 : f32
      %245 = vector.broadcast %cst_66 : f32 to vector<2x256xf32>
      %c0_67 = arith.constant 0 : index
      %c80 = arith.constant 80 : index
      %246 = vector.load %arg8[%c0_67, %c80] : memref<2x512xf32, #tpu.memory_space<vmem>>, vector<2x256xf32>
      %c3 = arith.constant 3 : index
      %247 = memref.load %arg2[%c3] : memref<98xf32, #tpu.memory_space<smem>>
      %248 = vector.broadcast %247 : f32 to vector<2x256xf32>
      %249 = arith.mulf %248, %246 : vector<2x256xf32>
      %250 = arith.addf %244, %249 : vector<2x256xf32>
      %c52 = arith.constant 52 : index
      %251 = memref.load %arg2[%c52] : memref<98xf32, #tpu.memory_space<smem>>
      %252 = vector.broadcast %251 : f32 to vector<2x256xf32>
      %253 = arith.mulf %252, %246 : vector<2x256xf32>
      %254 = arith.addf %245, %253 : vector<2x256xf32>
      %c0_68 = arith.constant 0 : index
      %c96 = arith.constant 96 : index
      %255 = vector.load %arg8[%c0_68, %c96] : memref<2x512xf32, #tpu.memory_space<vmem>>, vector<2x256xf32>
      %c10 = arith.constant 10 : index
      %256 = memref.load %arg2[%c10] : memref<98xf32, #tpu.memory_space<smem>>
      %257 = vector.broadcast %256 : f32 to vector<2x256xf32>
      %258 = arith.mulf %257, %255 : vector<2x256xf32>
      %259 = arith.addf %250, %258 : vector<2x256xf32>
      %c59 = arith.constant 59 : index
      %260 = memref.load %arg2[%c59] : memref<98xf32, #tpu.memory_space<smem>>
      %261 = vector.broadcast %260 : f32 to vector<2x256xf32>
      %262 = arith.mulf %261, %255 : vector<2x256xf32>
      %263 = arith.addf %254, %262 : vector<2x256xf32>
      %c0_69 = arith.constant 0 : index
      %c112 = arith.constant 112 : index
      %264 = vector.load %arg8[%c0_69, %c112] : memref<2x512xf32, #tpu.memory_space<vmem>>, vector<2x256xf32>
      %c17 = arith.constant 17 : index
      %265 = memref.load %arg2[%c17] : memref<98xf32, #tpu.memory_space<smem>>
      %266 = vector.broadcast %265 : f32 to vector<2x256xf32>
      %267 = arith.mulf %266, %264 : vector<2x256xf32>
      %268 = arith.addf %259, %267 : vector<2x256xf32>
      %c66 = arith.constant 66 : index
      %269 = memref.load %arg2[%c66] : memref<98xf32, #tpu.memory_space<smem>>
      %270 = vector.broadcast %269 : f32 to vector<2x256xf32>
      %271 = arith.mulf %270, %264 : vector<2x256xf32>
      %272 = arith.addf %263, %271 : vector<2x256xf32>
      %c0_70 = arith.constant 0 : index
      %c128_71 = arith.constant 128 : index
      %273 = vector.load %arg8[%c0_70, %c128_71] : memref<2x512xf32, #tpu.memory_space<vmem>>, vector<2x256xf32>
      %c24 = arith.constant 24 : index
      %274 = memref.load %arg2[%c24] : memref<98xf32, #tpu.memory_space<smem>>
      %275 = vector.broadcast %274 : f32 to vector<2x256xf32>
      %276 = arith.mulf %275, %273 : vector<2x256xf32>
      %277 = arith.addf %268, %276 : vector<2x256xf32>
      %c73 = arith.constant 73 : index
      %278 = memref.load %arg2[%c73] : memref<98xf32, #tpu.memory_space<smem>>
      %279 = vector.broadcast %278 : f32 to vector<2x256xf32>
      %280 = arith.mulf %279, %273 : vector<2x256xf32>
      %281 = arith.addf %272, %280 : vector<2x256xf32>
      %c0_72 = arith.constant 0 : index
      %c144 = arith.constant 144 : index
      %282 = vector.load %arg8[%c0_72, %c144] : memref<2x512xf32, #tpu.memory_space<vmem>>, vector<2x256xf32>
      %c31 = arith.constant 31 : index
      %283 = memref.load %arg2[%c31] : memref<98xf32, #tpu.memory_space<smem>>
      %284 = vector.broadcast %283 : f32 to vector<2x256xf32>
      %285 = arith.mulf %284, %282 : vector<2x256xf32>
      %286 = arith.addf %277, %285 : vector<2x256xf32>
      %c80_73 = arith.constant 80 : index
      %287 = memref.load %arg2[%c80_73] : memref<98xf32, #tpu.memory_space<smem>>
      %288 = vector.broadcast %287 : f32 to vector<2x256xf32>
      %289 = arith.mulf %288, %282 : vector<2x256xf32>
      %290 = arith.addf %281, %289 : vector<2x256xf32>
      %c0_74 = arith.constant 0 : index
      %c160 = arith.constant 160 : index
      %291 = vector.load %arg8[%c0_74, %c160] : memref<2x512xf32, #tpu.memory_space<vmem>>, vector<2x256xf32>
      %c38 = arith.constant 38 : index
      %292 = memref.load %arg2[%c38] : memref<98xf32, #tpu.memory_space<smem>>
      %293 = vector.broadcast %292 : f32 to vector<2x256xf32>
      %294 = arith.mulf %293, %291 : vector<2x256xf32>
      %295 = arith.addf %286, %294 : vector<2x256xf32>
      %c87 = arith.constant 87 : index
      %296 = memref.load %arg2[%c87] : memref<98xf32, #tpu.memory_space<smem>>
      %297 = vector.broadcast %296 : f32 to vector<2x256xf32>
      %298 = arith.mulf %297, %291 : vector<2x256xf32>
      %299 = arith.addf %290, %298 : vector<2x256xf32>
      %c0_75 = arith.constant 0 : index
      %c176 = arith.constant 176 : index
      %300 = vector.load %arg8[%c0_75, %c176] : memref<2x512xf32, #tpu.memory_space<vmem>>, vector<2x256xf32>
      %c45 = arith.constant 45 : index
      %301 = memref.load %arg2[%c45] : memref<98xf32, #tpu.memory_space<smem>>
      %302 = vector.broadcast %301 : f32 to vector<2x256xf32>
      %303 = arith.mulf %302, %300 : vector<2x256xf32>
      %304 = arith.addf %295, %303 : vector<2x256xf32>
      %c94_76 = arith.constant 94 : index
      %305 = memref.load %arg2[%c94_76] : memref<98xf32, #tpu.memory_space<smem>>
      %306 = vector.broadcast %305 : f32 to vector<2x256xf32>
      %307 = arith.mulf %306, %300 : vector<2x256xf32>
      %308 = arith.addf %299, %307 : vector<2x256xf32>
      %c3_77 = arith.constant 3 : index
      %c0_78 = arith.constant 0 : index
      %309 = vector.load %arg3[%c3_77, %c0_78] : memref<7x256xf32, #tpu.memory_space<vmem>>, vector<1x256xf32>
      %310 = vector.broadcast %309 : vector<1x256xf32> to vector<2x256xf32>
      %311 = arith.mulf %304, %310 : vector<2x256xf32>
      %312 = arith.addf %240, %311 : vector<2x256xf32>
      %313 = vector.broadcast %309 : vector<1x256xf32> to vector<2x256xf32>
      %314 = arith.mulf %308, %313 : vector<2x256xf32>
      %315 = arith.addf %243, %314 : vector<2x256xf32>
      %cst_79 = arith.constant 0.000000e+00 : f32
      %316 = vector.broadcast %cst_79 : f32 to vector<2x256xf32>
      %cst_80 = arith.constant 0.000000e+00 : f32
      %317 = vector.broadcast %cst_80 : f32 to vector<2x256xf32>
      %c0_81 = arith.constant 0 : index
      %c81 = arith.constant 81 : index
      %318 = vector.load %arg8[%c0_81, %c81] : memref<2x512xf32, #tpu.memory_space<vmem>>, vector<2x256xf32>
      %c4 = arith.constant 4 : index
      %319 = memref.load %arg2[%c4] : memref<98xf32, #tpu.memory_space<smem>>
      %320 = vector.broadcast %319 : f32 to vector<2x256xf32>
      %321 = arith.mulf %320, %318 : vector<2x256xf32>
      %322 = arith.addf %316, %321 : vector<2x256xf32>
      %c53 = arith.constant 53 : index
      %323 = memref.load %arg2[%c53] : memref<98xf32, #tpu.memory_space<smem>>
      %324 = vector.broadcast %323 : f32 to vector<2x256xf32>
      %325 = arith.mulf %324, %318 : vector<2x256xf32>
      %326 = arith.addf %317, %325 : vector<2x256xf32>
      %c0_82 = arith.constant 0 : index
      %c97 = arith.constant 97 : index
      %327 = vector.load %arg8[%c0_82, %c97] : memref<2x512xf32, #tpu.memory_space<vmem>>, vector<2x256xf32>
      %c11 = arith.constant 11 : index
      %328 = memref.load %arg2[%c11] : memref<98xf32, #tpu.memory_space<smem>>
      %329 = vector.broadcast %328 : f32 to vector<2x256xf32>
      %330 = arith.mulf %329, %327 : vector<2x256xf32>
      %331 = arith.addf %322, %330 : vector<2x256xf32>
      %c60 = arith.constant 60 : index
      %332 = memref.load %arg2[%c60] : memref<98xf32, #tpu.memory_space<smem>>
      %333 = vector.broadcast %332 : f32 to vector<2x256xf32>
      %334 = arith.mulf %333, %327 : vector<2x256xf32>
      %335 = arith.addf %326, %334 : vector<2x256xf32>
      %c0_83 = arith.constant 0 : index
      %c113 = arith.constant 113 : index
      %336 = vector.load %arg8[%c0_83, %c113] : memref<2x512xf32, #tpu.memory_space<vmem>>, vector<2x256xf32>
      %c18 = arith.constant 18 : index
      %337 = memref.load %arg2[%c18] : memref<98xf32, #tpu.memory_space<smem>>
      %338 = vector.broadcast %337 : f32 to vector<2x256xf32>
      %339 = arith.mulf %338, %336 : vector<2x256xf32>
      %340 = arith.addf %331, %339 : vector<2x256xf32>
      %c67 = arith.constant 67 : index
      %341 = memref.load %arg2[%c67] : memref<98xf32, #tpu.memory_space<smem>>
      %342 = vector.broadcast %341 : f32 to vector<2x256xf32>
      %343 = arith.mulf %342, %336 : vector<2x256xf32>
      %344 = arith.addf %335, %343 : vector<2x256xf32>
      %c0_84 = arith.constant 0 : index
      %c129 = arith.constant 129 : index
      %345 = vector.load %arg8[%c0_84, %c129] : memref<2x512xf32, #tpu.memory_space<vmem>>, vector<2x256xf32>
      %c25 = arith.constant 25 : index
      %346 = memref.load %arg2[%c25] : memref<98xf32, #tpu.memory_space<smem>>
      %347 = vector.broadcast %346 : f32 to vector<2x256xf32>
      %348 = arith.mulf %347, %345 : vector<2x256xf32>
      %349 = arith.addf %340, %348 : vector<2x256xf32>
      %c74 = arith.constant 74 : index
      %350 = memref.load %arg2[%c74] : memref<98xf32, #tpu.memory_space<smem>>
      %351 = vector.broadcast %350 : f32 to vector<2x256xf32>
      %352 = arith.mulf %351, %345 : vector<2x256xf32>
      %353 = arith.addf %344, %352 : vector<2x256xf32>
      %c0_85 = arith.constant 0 : index
      %c145 = arith.constant 145 : index
      %354 = vector.load %arg8[%c0_85, %c145] : memref<2x512xf32, #tpu.memory_space<vmem>>, vector<2x256xf32>
      %c32 = arith.constant 32 : index
      %355 = memref.load %arg2[%c32] : memref<98xf32, #tpu.memory_space<smem>>
      %356 = vector.broadcast %355 : f32 to vector<2x256xf32>
      %357 = arith.mulf %356, %354 : vector<2x256xf32>
      %358 = arith.addf %349, %357 : vector<2x256xf32>
      %c81_86 = arith.constant 81 : index
      %359 = memref.load %arg2[%c81_86] : memref<98xf32, #tpu.memory_space<smem>>
      %360 = vector.broadcast %359 : f32 to vector<2x256xf32>
      %361 = arith.mulf %360, %354 : vector<2x256xf32>
      %362 = arith.addf %353, %361 : vector<2x256xf32>
      %c0_87 = arith.constant 0 : index
      %c161 = arith.constant 161 : index
      %363 = vector.load %arg8[%c0_87, %c161] : memref<2x512xf32, #tpu.memory_space<vmem>>, vector<2x256xf32>
      %c39 = arith.constant 39 : index
      %364 = memref.load %arg2[%c39] : memref<98xf32, #tpu.memory_space<smem>>
      %365 = vector.broadcast %364 : f32 to vector<2x256xf32>
      %366 = arith.mulf %365, %363 : vector<2x256xf32>
      %367 = arith.addf %358, %366 : vector<2x256xf32>
      %c88 = arith.constant 88 : index
      %368 = memref.load %arg2[%c88] : memref<98xf32, #tpu.memory_space<smem>>
      %369 = vector.broadcast %368 : f32 to vector<2x256xf32>
      %370 = arith.mulf %369, %363 : vector<2x256xf32>
      %371 = arith.addf %362, %370 : vector<2x256xf32>
      %c0_88 = arith.constant 0 : index
      %c177 = arith.constant 177 : index
      %372 = vector.load %arg8[%c0_88, %c177] : memref<2x512xf32, #tpu.memory_space<vmem>>, vector<2x256xf32>
      %c46 = arith.constant 46 : index
      %373 = memref.load %arg2[%c46] : memref<98xf32, #tpu.memory_space<smem>>
      %374 = vector.broadcast %373 : f32 to vector<2x256xf32>
      %375 = arith.mulf %374, %372 : vector<2x256xf32>
      %376 = arith.addf %367, %375 : vector<2x256xf32>
      %c95_89 = arith.constant 95 : index
      %377 = memref.load %arg2[%c95_89] : memref<98xf32, #tpu.memory_space<smem>>
      %378 = vector.broadcast %377 : f32 to vector<2x256xf32>
      %379 = arith.mulf %378, %372 : vector<2x256xf32>
      %380 = arith.addf %371, %379 : vector<2x256xf32>
      %c4_90 = arith.constant 4 : index
      %c0_91 = arith.constant 0 : index
      %381 = vector.load %arg3[%c4_90, %c0_91] : memref<7x256xf32, #tpu.memory_space<vmem>>, vector<1x256xf32>
      %382 = vector.broadcast %381 : vector<1x256xf32> to vector<2x256xf32>
      %383 = arith.mulf %376, %382 : vector<2x256xf32>
      %384 = arith.addf %312, %383 : vector<2x256xf32>
      %385 = vector.broadcast %381 : vector<1x256xf32> to vector<2x256xf32>
      %386 = arith.mulf %380, %385 : vector<2x256xf32>
      %387 = arith.addf %315, %386 : vector<2x256xf32>
      %cst_92 = arith.constant 0.000000e+00 : f32
      %388 = vector.broadcast %cst_92 : f32 to vector<2x256xf32>
      %cst_93 = arith.constant 0.000000e+00 : f32
      %389 = vector.broadcast %cst_93 : f32 to vector<2x256xf32>
      %c0_94 = arith.constant 0 : index
      %c82 = arith.constant 82 : index
      %390 = vector.load %arg8[%c0_94, %c82] : memref<2x512xf32, #tpu.memory_space<vmem>>, vector<2x256xf32>
      %c5 = arith.constant 5 : index
      %391 = memref.load %arg2[%c5] : memref<98xf32, #tpu.memory_space<smem>>
      %392 = vector.broadcast %391 : f32 to vector<2x256xf32>
      %393 = arith.mulf %392, %390 : vector<2x256xf32>
      %394 = arith.addf %388, %393 : vector<2x256xf32>
      %c54 = arith.constant 54 : index
      %395 = memref.load %arg2[%c54] : memref<98xf32, #tpu.memory_space<smem>>
      %396 = vector.broadcast %395 : f32 to vector<2x256xf32>
      %397 = arith.mulf %396, %390 : vector<2x256xf32>
      %398 = arith.addf %389, %397 : vector<2x256xf32>
      %c0_95 = arith.constant 0 : index
      %c98 = arith.constant 98 : index
      %399 = vector.load %arg8[%c0_95, %c98] : memref<2x512xf32, #tpu.memory_space<vmem>>, vector<2x256xf32>
      %c12 = arith.constant 12 : index
      %400 = memref.load %arg2[%c12] : memref<98xf32, #tpu.memory_space<smem>>
      %401 = vector.broadcast %400 : f32 to vector<2x256xf32>
      %402 = arith.mulf %401, %399 : vector<2x256xf32>
      %403 = arith.addf %394, %402 : vector<2x256xf32>
      %c61 = arith.constant 61 : index
      %404 = memref.load %arg2[%c61] : memref<98xf32, #tpu.memory_space<smem>>
      %405 = vector.broadcast %404 : f32 to vector<2x256xf32>
      %406 = arith.mulf %405, %399 : vector<2x256xf32>
      %407 = arith.addf %398, %406 : vector<2x256xf32>
      %c0_96 = arith.constant 0 : index
      %c114 = arith.constant 114 : index
      %408 = vector.load %arg8[%c0_96, %c114] : memref<2x512xf32, #tpu.memory_space<vmem>>, vector<2x256xf32>
      %c19 = arith.constant 19 : index
      %409 = memref.load %arg2[%c19] : memref<98xf32, #tpu.memory_space<smem>>
      %410 = vector.broadcast %409 : f32 to vector<2x256xf32>
      %411 = arith.mulf %410, %408 : vector<2x256xf32>
      %412 = arith.addf %403, %411 : vector<2x256xf32>
      %c68 = arith.constant 68 : index
      %413 = memref.load %arg2[%c68] : memref<98xf32, #tpu.memory_space<smem>>
      %414 = vector.broadcast %413 : f32 to vector<2x256xf32>
      %415 = arith.mulf %414, %408 : vector<2x256xf32>
      %416 = arith.addf %407, %415 : vector<2x256xf32>
      %c0_97 = arith.constant 0 : index
      %c130 = arith.constant 130 : index
      %417 = vector.load %arg8[%c0_97, %c130] : memref<2x512xf32, #tpu.memory_space<vmem>>, vector<2x256xf32>
      %c26 = arith.constant 26 : index
      %418 = memref.load %arg2[%c26] : memref<98xf32, #tpu.memory_space<smem>>
      %419 = vector.broadcast %418 : f32 to vector<2x256xf32>
      %420 = arith.mulf %419, %417 : vector<2x256xf32>
      %421 = arith.addf %412, %420 : vector<2x256xf32>
      %c75 = arith.constant 75 : index
      %422 = memref.load %arg2[%c75] : memref<98xf32, #tpu.memory_space<smem>>
      %423 = vector.broadcast %422 : f32 to vector<2x256xf32>
      %424 = arith.mulf %423, %417 : vector<2x256xf32>
      %425 = arith.addf %416, %424 : vector<2x256xf32>
      %c0_98 = arith.constant 0 : index
      %c146 = arith.constant 146 : index
      %426 = vector.load %arg8[%c0_98, %c146] : memref<2x512xf32, #tpu.memory_space<vmem>>, vector<2x256xf32>
      %c33 = arith.constant 33 : index
      %427 = memref.load %arg2[%c33] : memref<98xf32, #tpu.memory_space<smem>>
      %428 = vector.broadcast %427 : f32 to vector<2x256xf32>
      %429 = arith.mulf %428, %426 : vector<2x256xf32>
      %430 = arith.addf %421, %429 : vector<2x256xf32>
      %c82_99 = arith.constant 82 : index
      %431 = memref.load %arg2[%c82_99] : memref<98xf32, #tpu.memory_space<smem>>
      %432 = vector.broadcast %431 : f32 to vector<2x256xf32>
      %433 = arith.mulf %432, %426 : vector<2x256xf32>
      %434 = arith.addf %425, %433 : vector<2x256xf32>
      %c0_100 = arith.constant 0 : index
      %c162 = arith.constant 162 : index
      %435 = vector.load %arg8[%c0_100, %c162] : memref<2x512xf32, #tpu.memory_space<vmem>>, vector<2x256xf32>
      %c40 = arith.constant 40 : index
      %436 = memref.load %arg2[%c40] : memref<98xf32, #tpu.memory_space<smem>>
      %437 = vector.broadcast %436 : f32 to vector<2x256xf32>
      %438 = arith.mulf %437, %435 : vector<2x256xf32>
      %439 = arith.addf %430, %438 : vector<2x256xf32>
      %c89 = arith.constant 89 : index
      %440 = memref.load %arg2[%c89] : memref<98xf32, #tpu.memory_space<smem>>
      %441 = vector.broadcast %440 : f32 to vector<2x256xf32>
      %442 = arith.mulf %441, %435 : vector<2x256xf32>
      %443 = arith.addf %434, %442 : vector<2x256xf32>
      %c0_101 = arith.constant 0 : index
      %c178 = arith.constant 178 : index
      %444 = vector.load %arg8[%c0_101, %c178] : memref<2x512xf32, #tpu.memory_space<vmem>>, vector<2x256xf32>
      %c47 = arith.constant 47 : index
      %445 = memref.load %arg2[%c47] : memref<98xf32, #tpu.memory_space<smem>>
      %446 = vector.broadcast %445 : f32 to vector<2x256xf32>
      %447 = arith.mulf %446, %444 : vector<2x256xf32>
      %448 = arith.addf %439, %447 : vector<2x256xf32>
      %c96_102 = arith.constant 96 : index
      %449 = memref.load %arg2[%c96_102] : memref<98xf32, #tpu.memory_space<smem>>
      %450 = vector.broadcast %449 : f32 to vector<2x256xf32>
      %451 = arith.mulf %450, %444 : vector<2x256xf32>
      %452 = arith.addf %443, %451 : vector<2x256xf32>
      %c5_103 = arith.constant 5 : index
      %c0_104 = arith.constant 0 : index
      %453 = vector.load %arg3[%c5_103, %c0_104] : memref<7x256xf32, #tpu.memory_space<vmem>>, vector<1x256xf32>
      %454 = vector.broadcast %453 : vector<1x256xf32> to vector<2x256xf32>
      %455 = arith.mulf %448, %454 : vector<2x256xf32>
      %456 = arith.addf %384, %455 : vector<2x256xf32>
      %457 = vector.broadcast %453 : vector<1x256xf32> to vector<2x256xf32>
      %458 = arith.mulf %452, %457 : vector<2x256xf32>
      %459 = arith.addf %387, %458 : vector<2x256xf32>
      %cst_105 = arith.constant 0.000000e+00 : f32
      %460 = vector.broadcast %cst_105 : f32 to vector<2x256xf32>
      %cst_106 = arith.constant 0.000000e+00 : f32
      %461 = vector.broadcast %cst_106 : f32 to vector<2x256xf32>
      %c0_107 = arith.constant 0 : index
      %c83 = arith.constant 83 : index
      %462 = vector.load %arg8[%c0_107, %c83] : memref<2x512xf32, #tpu.memory_space<vmem>>, vector<2x256xf32>
      %c6 = arith.constant 6 : index
      %463 = memref.load %arg2[%c6] : memref<98xf32, #tpu.memory_space<smem>>
      %464 = vector.broadcast %463 : f32 to vector<2x256xf32>
      %465 = arith.mulf %464, %462 : vector<2x256xf32>
      %466 = arith.addf %460, %465 : vector<2x256xf32>
      %c55 = arith.constant 55 : index
      %467 = memref.load %arg2[%c55] : memref<98xf32, #tpu.memory_space<smem>>
      %468 = vector.broadcast %467 : f32 to vector<2x256xf32>
      %469 = arith.mulf %468, %462 : vector<2x256xf32>
      %470 = arith.addf %461, %469 : vector<2x256xf32>
      %c0_108 = arith.constant 0 : index
      %c99 = arith.constant 99 : index
      %471 = vector.load %arg8[%c0_108, %c99] : memref<2x512xf32, #tpu.memory_space<vmem>>, vector<2x256xf32>
      %c13 = arith.constant 13 : index
      %472 = memref.load %arg2[%c13] : memref<98xf32, #tpu.memory_space<smem>>
      %473 = vector.broadcast %472 : f32 to vector<2x256xf32>
      %474 = arith.mulf %473, %471 : vector<2x256xf32>
      %475 = arith.addf %466, %474 : vector<2x256xf32>
      %c62 = arith.constant 62 : index
      %476 = memref.load %arg2[%c62] : memref<98xf32, #tpu.memory_space<smem>>
      %477 = vector.broadcast %476 : f32 to vector<2x256xf32>
      %478 = arith.mulf %477, %471 : vector<2x256xf32>
      %479 = arith.addf %470, %478 : vector<2x256xf32>
      %c0_109 = arith.constant 0 : index
      %c115 = arith.constant 115 : index
      %480 = vector.load %arg8[%c0_109, %c115] : memref<2x512xf32, #tpu.memory_space<vmem>>, vector<2x256xf32>
      %c20 = arith.constant 20 : index
      %481 = memref.load %arg2[%c20] : memref<98xf32, #tpu.memory_space<smem>>
      %482 = vector.broadcast %481 : f32 to vector<2x256xf32>
      %483 = arith.mulf %482, %480 : vector<2x256xf32>
      %484 = arith.addf %475, %483 : vector<2x256xf32>
      %c69 = arith.constant 69 : index
      %485 = memref.load %arg2[%c69] : memref<98xf32, #tpu.memory_space<smem>>
      %486 = vector.broadcast %485 : f32 to vector<2x256xf32>
      %487 = arith.mulf %486, %480 : vector<2x256xf32>
      %488 = arith.addf %479, %487 : vector<2x256xf32>
      %c0_110 = arith.constant 0 : index
      %c131 = arith.constant 131 : index
      %489 = vector.load %arg8[%c0_110, %c131] : memref<2x512xf32, #tpu.memory_space<vmem>>, vector<2x256xf32>
      %c27 = arith.constant 27 : index
      %490 = memref.load %arg2[%c27] : memref<98xf32, #tpu.memory_space<smem>>
      %491 = vector.broadcast %490 : f32 to vector<2x256xf32>
      %492 = arith.mulf %491, %489 : vector<2x256xf32>
      %493 = arith.addf %484, %492 : vector<2x256xf32>
      %c76 = arith.constant 76 : index
      %494 = memref.load %arg2[%c76] : memref<98xf32, #tpu.memory_space<smem>>
      %495 = vector.broadcast %494 : f32 to vector<2x256xf32>
      %496 = arith.mulf %495, %489 : vector<2x256xf32>
      %497 = arith.addf %488, %496 : vector<2x256xf32>
      %c0_111 = arith.constant 0 : index
      %c147 = arith.constant 147 : index
      %498 = vector.load %arg8[%c0_111, %c147] : memref<2x512xf32, #tpu.memory_space<vmem>>, vector<2x256xf32>
      %c34 = arith.constant 34 : index
      %499 = memref.load %arg2[%c34] : memref<98xf32, #tpu.memory_space<smem>>
      %500 = vector.broadcast %499 : f32 to vector<2x256xf32>
      %501 = arith.mulf %500, %498 : vector<2x256xf32>
      %502 = arith.addf %493, %501 : vector<2x256xf32>
      %c83_112 = arith.constant 83 : index
      %503 = memref.load %arg2[%c83_112] : memref<98xf32, #tpu.memory_space<smem>>
      %504 = vector.broadcast %503 : f32 to vector<2x256xf32>
      %505 = arith.mulf %504, %498 : vector<2x256xf32>
      %506 = arith.addf %497, %505 : vector<2x256xf32>
      %c0_113 = arith.constant 0 : index
      %c163 = arith.constant 163 : index
      %507 = vector.load %arg8[%c0_113, %c163] : memref<2x512xf32, #tpu.memory_space<vmem>>, vector<2x256xf32>
      %c41 = arith.constant 41 : index
      %508 = memref.load %arg2[%c41] : memref<98xf32, #tpu.memory_space<smem>>
      %509 = vector.broadcast %508 : f32 to vector<2x256xf32>
      %510 = arith.mulf %509, %507 : vector<2x256xf32>
      %511 = arith.addf %502, %510 : vector<2x256xf32>
      %c90 = arith.constant 90 : index
      %512 = memref.load %arg2[%c90] : memref<98xf32, #tpu.memory_space<smem>>
      %513 = vector.broadcast %512 : f32 to vector<2x256xf32>
      %514 = arith.mulf %513, %507 : vector<2x256xf32>
      %515 = arith.addf %506, %514 : vector<2x256xf32>
      %c0_114 = arith.constant 0 : index
      %c179 = arith.constant 179 : index
      %516 = vector.load %arg8[%c0_114, %c179] : memref<2x512xf32, #tpu.memory_space<vmem>>, vector<2x256xf32>
      %c48 = arith.constant 48 : index
      %517 = memref.load %arg2[%c48] : memref<98xf32, #tpu.memory_space<smem>>
      %518 = vector.broadcast %517 : f32 to vector<2x256xf32>
      %519 = arith.mulf %518, %516 : vector<2x256xf32>
      %520 = arith.addf %511, %519 : vector<2x256xf32>
      %c97_115 = arith.constant 97 : index
      %521 = memref.load %arg2[%c97_115] : memref<98xf32, #tpu.memory_space<smem>>
      %522 = vector.broadcast %521 : f32 to vector<2x256xf32>
      %523 = arith.mulf %522, %516 : vector<2x256xf32>
      %524 = arith.addf %515, %523 : vector<2x256xf32>
      %c6_116 = arith.constant 6 : index
      %c0_117 = arith.constant 0 : index
      %525 = vector.load %arg3[%c6_116, %c0_117] : memref<7x256xf32, #tpu.memory_space<vmem>>, vector<1x256xf32>
      %526 = vector.broadcast %525 : vector<1x256xf32> to vector<2x256xf32>
      %527 = arith.mulf %520, %526 : vector<2x256xf32>
      %528 = arith.addf %456, %527 : vector<2x256xf32>
      %529 = vector.broadcast %525 : vector<1x256xf32> to vector<2x256xf32>
      %530 = arith.mulf %524, %529 : vector<2x256xf32>
      %531 = arith.addf %459, %530 : vector<2x256xf32>
      %532 = vector.extract_strided_slice %528 {offsets = [0, 0], sizes = [1, 256], strides = [1, 1]} : vector<2x256xf32> to vector<1x256xf32>
      %533 = vector.extract_strided_slice %531 {offsets = [1, 0], sizes = [1, 256], strides = [1, 1]} : vector<2x256xf32> to vector<1x256xf32>
      %534 = arith.addf %532, %533 : vector<1x256xf32>
      %535 = arith.negf %534 : vector<1x256xf32>
      %536 = math.exp %535 : vector<1x256xf32>
      %cst_118 = arith.constant 1.000000e+00 : f32
      %537 = vector.broadcast %cst_118 : f32 to vector<1x256xf32>
      %538 = arith.addf %537, %536 : vector<1x256xf32>
      %539 = arith.divf %537, %538 : vector<1x256xf32>
      %c0_119 = arith.constant 0 : index
      %c0_120 = arith.constant 0 : index
      %c0_121 = arith.constant 0 : index
      %540 = vector.load %arg5[%c0_119, %c0_120, %c0_121] : memref<1x1x256xf32, #tpu.memory_space<vmem>>, vector<1x1x256xf32>
      %541 = vector.shape_cast %540 : vector<1x1x256xf32> to vector<1x256xf32>
      %542 = vector.shape_cast %539 : vector<1x256xf32> to vector<1x1x256xf32>
      tpu.vector_store %arg5[%c0_119, %c0_120, %c0_121], %542 {strides = array<i32>} : memref<1x1x256xf32, #tpu.memory_space<vmem>>, vector<1x1x256xf32>,
    } else {
    }
    return
  }
  func.func @transform_0(%arg0: i32, %arg1: i32) -> i32 {
    %c0_i32 = arith.constant 0 : i32
    %c0_i32_0 = arith.constant 0 : i32
    return %c0_i32 : i32
  }
  func.func @transform_1(%arg0: i32, %arg1: i32) -> (i32, i32) {
    %c0_i32 = arith.constant 0 : i32
    %c0_i32_0 = arith.constant 0 : i32
    %c0_i32_1 = arith.constant 0 : i32
    return %c0_i32, %c0_i32_0 : i32, i32
  }
  func.func @transform_2(%arg0: i32, %arg1: i32) -> (i32, i32, i32) {
    %c0_i32 = arith.constant 0 : i32
    %c0_i32_0 = arith.constant 0 : i32
    return %arg0, %arg1, %c0_i32 : i32, i32, i32
  }
  func.func @transform_3(%arg0: i32, %arg1: i32) -> (i32, i32, i32) {
    %c0_i32 = arith.constant 0 : i32
    %c0_i32_0 = arith.constant 0 : i32
    %c0_i32_1 = arith.constant 0 : i32
    return %arg0, %c0_i32, %c0_i32_0 : i32, i32, i32
  }
}

</mosaic_0001>

<llo_original>
// kernel: spatial_attention.1
$region0: #{spatial_attention.1}
  #allocation0 [shape = 'u32[]', space=smem, size = 0x4, offset = 0x4, fixed_abs, tag = 'smem constant byte address 0x4 - core index']
  #allocation1 [shape = 'u32[72,128]{1,0:T(1,128)}', space=vmem, size = 0x9000, scoped, tag = 'internal scratch']
  #allocation2 [shape = 'f32[1,256]{1,0:T(1,128)}', space=vmem, size = 0x400, scoped, tag = 'scratch operand']
  #allocation3 [shape = 'f32[1,256]{1,0:T(1,128)}', space=vmem, size = 0x400, scoped, tag = 'scratch operand']
  #allocation4 [shape = 'f32[2,512]{1,0:T(2,128)}', space=vmem, size = 0x1000, scoped, tag = 'scratch operand']
  %s0 = inlined_call_operand.vmem [shape: f32[98], index: 0, kind: input, shape index: {}]
  %s1 = inlined_call_operand.vmem [shape: f32[7,256], index: 1, kind: input, shape index: {}]
  %s2 = inlined_call_operand.vmem [shape: f32[2,4,256], index: 2, kind: input, shape index: {}]
  %s3 = inlined_call_operand.vmem [shape: f32[2,1,256], index: 3, kind: output, shape index: {}]
  %s4 = sld [smem:[#allocation0]]
  $region57: #{spatial_attention.1} parent=0
    _
  %s6 = ssub.s32 1, %s4
  %s7 = scalar_select 0, %s6, %s4
  $region1: #{spatial_attention.1} parent=0
    #allocation5 [shape = 'u8[512]{0}', space=smem, size = 0x200, scoped, tag = 'input window, operand 0, single buffered']
    #allocation6 [shape = 's32[2]{0}', space=sflag, size = 0x8, scoped, tag = 'scoped memory for spatial_attention.1']
    %8 = vsyncpa [#allocation6], 0
    loop: start=0, step=1, limit=4
    $region2: #{spatial_attention.1} parent=1 // loop_pre_header
      _
    $region3: #{spatial_attention.1} parent=1 // loop_header
      %s10 = sphi 0, %s14
      %p11 = scmp.ge.s32.totalorder %s10, 4
      %s17 = sphi 0, %s29
      %s18 = sphi 0, %s25
      %s19 = sphi 0, %s17
      %s20 = sphi 0, %s18
      %s21 = sphi 0, %s19
      %s22 = sphi 0, %s20
      %s30 = sphi 0, %s30
      %s32 = sphi 0, %s30
      %s33 = sphi 0, %s32
      %s47 = sphi 0, %s33
      %s51 = sphi 0, %s51
      %s53 = sphi 0, %s51
      %s54 = sphi 0, %s53
      %s68 = sphi 0, %s54
      %s76 = sphi 0, %s78
      %s79 = sphi 0, %s76
      %s80 = sphi 0, %s79
      %s96 = sphi 0, %s80
      %s102 = sphi 0, %s104
      %s105 = sphi 0, %s102
      %s106 = sphi 0, %s105
      %s122 = sphi 0, %s106
    $region4: #{spatial_attention.1} parent=1 // loop_header_branch
      %13 = sbr.rel (%p11) target = $region8
    $region5: #{spatial_attention.1} parent=1 // loop_body
      %s15 = ssub.s32 %s10, 1
      %s16 = ssub.s32 %s10, 2
      %s23 = sadd.s32 1, %s18
      %p24 = scmp.ge.s32.totalorder %s23, 1
      %s25 = scalar_select %p24, 0, %s23
      %s26 = sadd.s32 1, %s17
      %s27 = scalar_select %p24, %s26, %s17
      %p28 = scmp.ge.s32.totalorder %s27, 2
      %s29 = scalar_select %p28, 0, %s27
      %s31 = sadd.s32 %s30, 1
      %p34 = scmp.eq.s32.totalorder %s10, 1
      %p35 = scmp.ne.s32.totalorder %s30, %s32
      %p36 = scmp.eq.s32.totalorder %s10, 0
      %p37 = por %p35, %p36
      %p38 = scmp.ne.s32.totalorder %s30, %s32
      %p39 = scmp.eq.s32.totalorder %s15, 1
      %p40 = por %p38, %p39
      %p41 = scmp.ne.s32.totalorder %s32, %s33
      %p42 = scmp.eq.s32.totalorder %s15, 0
      %p43 = por %p41, %p42
      %p44 = scmp.ne.s32.totalorder %s32, %s33
      %p45 = scmp.eq.s32.totalorder %s16, 1
      %p46 = por %p44, %p45
      %p48 = scmp.ne.s32.totalorder %s33, %s47
      %p49 = scmp.eq.s32.totalorder %s16, 0
      %p50 = por %p48, %p49
      %s52 = sadd.s32 %s51, 1
      %p55 = scmp.eq.s32.totalorder %s10, 1
      %p56 = scmp.ne.s32.totalorder %s51, %s53
      %p57 = scmp.eq.s32.totalorder %s10, 0
      %p58 = por %p56, %p57
      %p59 = scmp.ne.s32.totalorder %s51, %s53
      %p60 = scmp.eq.s32.totalorder %s15, 1
      %p61 = por %p59, %p60
      %p62 = scmp.ne.s32.totalorder %s53, %s54
      %p63 = scmp.eq.s32.totalorder %s15, 0
      %p64 = por %p62, %p63
      %p65 = scmp.ne.s32.totalorder %s53, %s54
      %p66 = scmp.eq.s32.totalorder %s16, 1
      %p67 = por %p65, %p66
      %p69 = scmp.ne.s32.totalorder %s54, %s68
      %p70 = scmp.eq.s32.totalorder %s16, 0
      %p71 = por %p69, %p70
      %s72 = ssub.s32 %s17, %s29
      %s73 = ssub.s32 %s18, %s25
      %s74 = sor.u32 %s72, %s73
      %p75 = scmp.eq.s32.totalorder %s74, 0
      %s77 = sadd.s32 %s76, 1
      %s78 = scalar_select %p75, %s76, %s77
      %p81 = pneg %p75
      %p82 = scmp.eq.s32.totalorder %s10, 1
      %p83 = por %p81, %p82
      %p84 = scmp.ne.s32.totalorder %s76, %s79
      %p85 = scmp.eq.s32.totalorder %s10, 0
      %p86 = por %p84, %p85
      %p87 = scmp.ne.s32.totalorder %s76, %s79
      %p88 = scmp.eq.s32.totalorder %s15, 1
      %p89 = por %p87, %p88
      %p90 = scmp.ne.s32.totalorder %s79, %s80
      %p91 = scmp.eq.s32.totalorder %s15, 0
      %p92 = por %p90, %p91
      %p93 = scmp.ne.s32.totalorder %s79, %s80
      %p94 = scmp.eq.s32.totalorder %s16, 1
      %p95 = por %p93, %p94
      %p97 = scmp.ne.s32.totalorder %s80, %s96
      %p98 = scmp.eq.s32.totalorder %s16, 0
      %p99 = por %p97, %p98
      %s100 = ssub.s32 %s17, %s29
      %p101 = scmp.eq.s32.totalorder %s100, 0
      %s103 = sadd.s32 %s102, 1
      %s104 = scalar_select %p101, %s102, %s103
      %p107 = pneg %p101
      %p108 = scmp.eq.s32.totalorder %s10, 1
      %p109 = por %p107, %p108
      %p110 = scmp.ne.s32.totalorder %s102, %s105
      %p111 = scmp.eq.s32.totalorder %s10, 0
      %p112 = por %p110, %p111
      %p113 = scmp.ne.s32.totalorder %s102, %s105
      %p114 = scmp.eq.s32.totalorder %s15, 1
      %p115 = por %p113, %p114
      %p116 = scmp.ne.s32.totalorder %s105, %s106
      %p117 = scmp.eq.s32.totalorder %s15, 0
      %p118 = por %p116, %p117
      %p119 = scmp.ne.s32.totalorder %s105, %s106
      %p120 = scmp.eq.s32.totalorder %s16, 1
      %p121 = por %p119, %p120
      %p123 = scmp.ne.s32.totalorder %s106, %s122
      %p124 = scmp.eq.s32.totalorder %s16, 0
      %p125 = por %p123, %p124
      %p126 = scmp.le.s32.totalorder 1, %s10
      %p127 = scmp.lt.s32.totalorder %s10, 3
      %p128 = pnand %p126, %p127
      %p129 = pneg %p128
      // Predicated region
      $region9: #{spatial_attention.1} parent=5 // pred_check
        _
      $region10: #{spatial_attention.1} parent=5 // pred_check_branch
        %131 = sbr.rel (%p128) target = $region12
      $region11: #{spatial_attention.1} parent=5 // pred_region
        %s132 = ssub.s32 %s10, 1
        // Predicated region
        $region13: #{spatial_attention.1} parent=11 // pred_check
          %p133 = pneg %p43
        $region14: #{spatial_attention.1} parent=11 // pred_check_branch
          %135 = sbr.rel (%p133) target = $region16
        $region15: #{spatial_attention.1} parent=11 // pred_region
          %137 = vsyncadd [#allocation6], 0
          %s139 = sshll.u32 %s0, 4
          %s140 = int_to_ptr.vmem [resolvable:$true] %s139
          %142 = dma.vmem_to_smem %s140, 16, [#allocation5], [#allocation6]
        $region16: #{spatial_attention.1} parent=11 // pred_fallthru
          _
        // Predicated region
        $region17: #{spatial_attention.1} parent=11 // pred_check
          %p143 = pneg %p64
        $region18: #{spatial_attention.1} parent=11 // pred_check_branch
          %145 = sbr.rel (%p143) target = $region20
        $region19: #{spatial_attention.1} parent=11 // pred_region
          _
        $region20: #{spatial_attention.1} parent=11 // pred_fallthru
          _
      $region12: #{spatial_attention.1} parent=5 // pred_fallthru
        _
      %p146 = scmp.lt.s32.totalorder %s10, 2
      // Predicated region
      $region21: #{spatial_attention.1} parent=5 // pred_check
        %p147 = pneg %p146
      $region22: #{spatial_attention.1} parent=5 // pred_check_branch
        %149 = sbr.rel (%p147) target = $region24
      $region23: #{spatial_attention.1} parent=5 // pred_region
        // Predicated region
        $region25: #{spatial_attention.1} parent=23 // pred_check
          %p150 = pneg %p86
        $region26: #{spatial_attention.1} parent=23 // pred_check_branch
          %152 = sbr.rel (%p150) target = $region28
        $region27: #{spatial_attention.1} parent=23 // pred_region
          %p153 = scmp.lt.s32.totalorder %s17, 1
          %s154 = scalar_select %p153, %s17, 1
          %p155 = scmp.lt.s32.totalorder %s18, 0
          %s156 = scalar_select %p155, %s18, 0
          %s157 = smul.addr %s156, 2
          %s158 = smul.addr %s154, 2
          %s159 = sadd.s32 %s157, %s158
          %s160 = smul.addr %s159, 4
          %s161 = scalar_lea.vmem %s2, %s160
        $region28: #{spatial_attention.1} parent=23 // pred_fallthru
          _
      $region24: #{spatial_attention.1} parent=5 // pred_fallthru
        _
      %p162 = scmp.le.s32.totalorder 1, %s10
      %p163 = scmp.lt.s32.totalorder %s10, 3
      %p164 = pnand %p162, %p163
      %p165 = pneg %p164
      // Predicated region
      $region29: #{spatial_attention.1} parent=5 // pred_check
        _
      $region30: #{spatial_attention.1} parent=5 // pred_check_branch
        %167 = sbr.rel (%p164) target = $region32
      $region31: #{spatial_attention.1} parent=5 // pred_region
        %s168 = ssub.s32 %s10, 1
        // Predicated region
        $region33: #{spatial_attention.1} parent=31 // pred_check
          %p169 = pneg %p43
        $region34: #{spatial_attention.1} parent=31 // pred_check_branch
          %171 = sbr.rel (%p169) target = $region36
        $region35: #{spatial_attention.1} parent=31 // pred_region
          %173 = dma.done [#allocation6], 16
        $region36: #{spatial_attention.1} parent=31 // pred_fallthru
          _
        %174 = sfence
        %p175 = pneg %p43
        %p176 = pneg %p40
        %p177 = pneg %p64
        %p178 = pneg %p61
        %p179 = scmp.lt.s32.totalorder %s19, 1
        %s180 = scalar_select %p179, %s19, 1
        %p181 = scmp.lt.s32.totalorder %s20, 0
        %s182 = scalar_select %p181, %s20, 0
        %s183 = smul.addr %s182, 2
        %s184 = smul.addr %s180, 2
        %s185 = sadd.s32 %s183, %s184
        %s186 = smul.addr %s185, 4
        %s187 = scalar_lea.vmem %s2, %s186
        %p188 = pneg %p92
        %p189 = pneg %p89
        %p190 = pneg %p118
        %p191 = pneg %p115
        %p192 = scmp.lt.s32.totalorder %s19, 1
        %s193 = scalar_select %p192, %s19, 1
        %s194 = smul.addr %s193, 2
        %s195 = scalar_lea.vmem %s3, %s194
        %p196 = scmp.lt.s32.totalorder %s19, 1
        %s197 = scalar_select %p196, %s19, 1
        %p198 = scmp.lt.s32.totalorder %s20, 0
        %s199 = scalar_select %p198, %s20, 0
        %s200 = smul.addr %s199, 2
        %s201 = smul.addr %s197, 2
        %s202 = sadd.s32 %s200, %s201
        %s203 = smul.addr %s202, 4
        %s204 = scalar_lea.vmem %s2, %s203
        %p205 = scmp.lt.s32.totalorder %s19, 1
        %s206 = scalar_select %p205, %s19, 1
        %s207 = smul.addr %s206, 2
        %s208 = scalar_lea.vmem %s3, %s207
        %p209 = scmp.eq.s32.totalorder %s20, 0
        // Predicated region
        $region37: #{spatial_attention.1} parent=31 // pred_check
          %p210 = pneg %p209
        $region38: #{spatial_attention.1} parent=31 // pred_check_branch
          %212 = sbr.rel (%p210) target = $region40
        $region39: #{spatial_attention.1} parent=31 // pred_region
          %v213 = vlaneseq
          %vm214 = vcmp.ge.s32.totalorder %v213, 0
          %vm215 = vcmp.lt.s32.totalorder %v213, 256
          %vm216 = vmand %vm214, %vm215
          %217 = vst.msk [vmem:[#allocation2] sm:$0x3] %vm216, 0.0
          %218 = vst.msk [vmem:[#allocation3] sm:$0x3] %vm216, -inf
        $region40: #{spatial_attention.1} parent=31 // pred_fallthru
          _
        %v219 = vld [vmem:[%s204] sm:$0xff]
        %v220 = vld [vmem:[#allocation2] sm:$0x3]
        %222 = vst [vmem:[#allocation1] ss:$2 sm:$0xff] %v219
        %v223 = vld.sshfl [vmem:[#allocation1] sm:$0xff pattern:$0x75316420]
        %v224 = vld.sshfl [vmem:[#allocation1 + $0x8] sm:$0xff pattern:$0x75316420]
        %vm227 = vcmask 1043456
        %v228 = vsel %vm227, %v223, 0.0
        %v229 = vrot.slane %v228, 4
        %v230 = vadd.f32 %v228, %v229
        %v231 = vrot.slane %v230, 2
        %v232 = vadd.f32 %v230, %v231
        %v233 = vrot.slane %v232, 1
        %v234 = vadd.f32 %v232, %v233
        %v235 = vsel %vm227, %v224, 0.0
        %v236 = vrot.slane %v235, 4
        %v237 = vadd.f32 %v235, %v236
        %v238 = vrot.slane %v237, 2
        %v239 = vadd.f32 %v237, %v238
        %v240 = vrot.slane %v239, 1
        %v241 = vadd.f32 %v239, %v240
        %v244 = vrot.slane %v241, 7
        %vm245 = vcmask 1040384
        %v246 = vsel %vm245, %v234, %v244
        %v248 = vadd.f32 %v220, %v246
        %v249 = vlaneseq
        %vm250 = vcmp.ge.s32.totalorder %v249, 0
        %vm251 = vcmp.lt.s32.totalorder %v249, 256
        %vm252 = vmand %vm250, %vm251
        %253 = vst.msk [vmem:[#allocation2] sm:$0x3] %vm252, %v248
        %v254 = vld [vmem:[#allocation3] sm:$0x3]
        %255 = vst [vmem:[#allocation1] ss:$2 sm:$0xff] %v219
        %v256 = vld.sshfl [vmem:[#allocation1] sm:$0xff pattern:$0x75316420]
        %v257 = vld.sshfl [vmem:[#allocation1 + $0x8] sm:$0xff pattern:$0x75316420]
        %v260 = vsel %vm227, %v256, -inf
        %v261 = vrot.slane %v260, 4
        %v262 = vmax.f32 %v260, %v261
        %v263 = vrot.slane %v262, 2
        %v264 = vmax.f32 %v262, %v263
        %v265 = vrot.slane %v264, 1
        %v266 = vmax.f32 %v264, %v265
        %v267 = vsel %vm227, %v257, -inf
        %v268 = vrot.slane %v267, 4
        %v269 = vmax.f32 %v267, %v268
        %v270 = vrot.slane %v269, 2
        %v271 = vmax.f32 %v269, %v270
        %v272 = vrot.slane %v271, 1
        %v273 = vmax.f32 %v271, %v272
        %v276 = vrot.slane %v273, 7
        %v277 = vsel %vm245, %v266, %v276
        %v279 = vmax.f32 %v254, %v277
        %280 = vst.msk [vmem:[#allocation3] sm:$0x3] %vm252, %v279
        // Predicated region
        $region41: #{spatial_attention.1} parent=31 // pred_check
          %p281 = pneg %p209
        $region42: #{spatial_attention.1} parent=31 // pred_check_branch
          %283 = sbr.rel (%p281) target = $region44
        $region43: #{spatial_attention.1} parent=31 // pred_region
          %284 = vst [vmem:[#allocation4] sm:$0xff] 0.0
          %v285 = vld [vmem:[#allocation2] sm:$0x3]
          %v286 = vmul.f32 %v285, 0.25
          %s287 = scalar_lea.vmem [#allocation4], 2
          %288 = vst.msk [vmem:[%s287] ss:$2 sm:$0x3] %vm252, %v286
          %v289 = vld [vmem:[#allocation3] sm:$0x3]
          %s290 = scalar_lea.vmem [#allocation4], 3
          %291 = vst.msk [vmem:[%s290] ss:$2 sm:$0x3] %vm252, %v289
          %v292 = vld [vmem:[#allocation4] sm:$0x3f]
          %s293 = sld [smem:[#allocation5]]
          %v294 = vstv %s293
          %v295 = vmul.f32 %v294, %v292
          %v296 = vadd.f32 %v295, 0.0
          %s297 = sld [smem:[#allocation5 + $0x31]]
          %v298 = vstv %s297
          %v299 = vmul.f32 %v298, %v292
          %v300 = vadd.f32 %v299, 0.0
          %s301 = sld [smem:[#allocation5 + $0x7]]
          %v302 = vstv %s301
          %v303 = vmul.f32 %v302, %v292
          %305 = vrot.lane.b32.xlu0 %v303, 112
          %v306 = vpop.permute.xlu0 %305
          %v307 = vrot.slane %v306, 2
          %vm308 = vcmask 916480
          %v309 = vsel %vm308, %v306, %v307
          %v311 = vadd.f32 %v296, %v309
          %s312 = sld [smem:[#allocation5 + $0x38]]
          %v313 = vstv %s312
          %v314 = vmul.f32 %v313, %v292
          %316 = vrot.lane.b32.xlu0 %v314, 112
          %v317 = vpop.permute.xlu0 %316
          %v318 = vrot.slane %v317, 2
          %v319 = vsel %vm308, %v317, %v318
          %v321 = vadd.f32 %v300, %v319
          %s322 = sld [smem:[#allocation5 + $0xe]]
          %v323 = vstv %s322
          %v324 = vmul.f32 %v323, %v292
          %326 = vrot.lane.b32.xlu0 %v324, 96
          %v327 = vpop.permute.xlu0 %326
          %v328 = vrot.slane %v327, 2
          %vm329 = vcmask 785408
          %v330 = vsel %vm329, %v327, %v328
          %v332 = vadd.f32 %v311, %v330
          %s333 = sld [smem:[#allocation5 + $0x3f]]
          %v334 = vstv %s333
          %v335 = vmul.f32 %v334, %v292
          %337 = vrot.lane.b32.xlu0 %v335, 96
          %v338 = vpop.permute.xlu0 %337
          %v339 = vrot.slane %v338, 2
          %v340 = vsel %vm329, %v338, %v339
          %v342 = vadd.f32 %v321, %v340
          %s343 = sld [smem:[#allocation5 + $0x15]]
          %v344 = vstv %s343
          %v345 = vmul.f32 %v344, %v292
          %347 = vrot.lane.b32.xlu0 %v345, 80
          %v348 = vpop.permute.xlu0 %347
          %v349 = vrot.slane %v348, 2
          %vm350 = vcmask 654336
          %v351 = vsel %vm350, %v348, %v349
          %v353 = vadd.f32 %v332, %v351
          %s354 = sld [smem:[#allocation5 + $0x46]]
          %v355 = vstv %s354
          %v356 = vmul.f32 %v355, %v292
          %358 = vrot.lane.b32.xlu0 %v356, 80
          %v359 = vpop.permute.xlu0 %358
          %v360 = vrot.slane %v359, 2
          %v361 = vsel %vm350, %v359, %v360
          %v363 = vadd.f32 %v342, %v361
          %v364 = vld [vmem:[#allocation4 + $0x2] sm:$0x3f]
          %s365 = sld [smem:[#allocation5 + $0x1c]]
          %v366 = vstv %s365
          %v367 = vmul.f32 %v366, %v364
          %369 = vrot.lane.b32.xlu0 %v367, 64
          %v370 = vpop.permute.xlu0 %369
          %v371 = vrot.slane %v370, 6
          %vm372 = vcmask 523264
          %v373 = vsel %vm372, %v371, %v370
          %v375 = vadd.f32 %v353, %v373
          %s376 = sld [smem:[#allocation5 + $0x4d]]
          %v377 = vstv %s376
          %v378 = vmul.f32 %v377, %v364
          %380 = vrot.lane.b32.xlu0 %v378, 64
          %v381 = vpop.permute.xlu0 %380
          %v382 = vrot.slane %v381, 6
          %v383 = vsel %vm372, %v382, %v381
          %v385 = vadd.f32 %v363, %v383
          %s386 = sld [smem:[#allocation5 + $0x23]]
          %v387 = vstv %s386
          %v388 = vmul.f32 %v387, %v364
          %390 = vrot.lane.b32.xlu0 %v388, 48
          %v391 = vpop.permute.xlu0 %390
          %v392 = vrot.slane %v391, 6
          %vm393 = vcmask 392192
          %v394 = vsel %vm393, %v392, %v391
          %v396 = vadd.f32 %v375, %v394
          %s397 = sld [smem:[#allocation5 + $0x54]]
          %v398 = vstv %s397
          %v399 = vmul.f32 %v398, %v364
          %401 = vrot.lane.b32.xlu0 %v399, 48
          %v402 = vpop.permute.xlu0 %401
          %v403 = vrot.slane %v402, 6
          %v404 = vsel %vm393, %v403, %v402
          %v406 = vadd.f32 %v385, %v404
          %s407 = sld [smem:[#allocation5 + $0x2a]]
          %v408 = vstv %s407
          %v409 = vmul.f32 %v408, %v364
          %411 = vrot.lane.b32.xlu0 %v409, 32
          %v412 = vpop.permute.xlu0 %411
          %v413 = vrot.slane %v412, 6
          %vm414 = vcmask 261120
          %v415 = vsel %vm414, %v413, %v412
          %v417 = vadd.f32 %v396, %v415
          %s418 = sld [smem:[#allocation5 + $0x5b]]
          %v419 = vstv %s418
          %v420 = vmul.f32 %v419, %v364
          %422 = vrot.lane.b32.xlu0 %v420, 32
          %v423 = vpop.permute.xlu0 %422
          %v424 = vrot.slane %v423, 6
          %v425 = vsel %vm414, %v424, %v423
          %v427 = vadd.f32 %v406, %v425
          %v428 = vld [vmem:[%s1] ss:$8 sm:$0x3]
          %v430 = vperm.slane %v428, 0
          %v431 = vperm.slane %v428, 1
          %v432 = vrot.slane %v431, 6
          %vm433 = vcmask 1041408
          %v434 = vsel %vm433, %v430, %v432
          %435 = vrot.lane.b32.xlu0 %v434, 77
          %v436 = vpop.permute.xlu0 %435
          %v437 = vrot.slane %v436, 6
          %vm438 = vcmask 629760
          %v439 = vsel %vm438, %v437, %v436
          %v441 = vmul.f32 %v417, %v439
          %v442 = vadd.f32 %v441, 0.0
          %v443 = vmul.f32 %v427, %v439
          %v444 = vadd.f32 %v443, 0.0
          %s445 = sld [smem:[#allocation5 + $0x1]]
          %v446 = vstv %s445
          %v447 = vmul.f32 %v446, %v292
          %v448 = vadd.f32 %v447, 0.0
          %s449 = sld [smem:[#allocation5 + $0x32]]
          %v450 = vstv %s449
          %v451 = vmul.f32 %v450, %v292
          %v452 = vadd.f32 %v451, 0.0
          %s453 = sld [smem:[#allocation5 + $0x8]]
          %v454 = vstv %s453
          %v455 = vmul.f32 %v454, %v292
          %457 = vrot.lane.b32.xlu0 %v455, 112
          %v458 = vpop.permute.xlu0 %457
          %v459 = vrot.slane %v458, 2
          %v460 = vsel %vm308, %v458, %v459
          %v462 = vadd.f32 %v448, %v460
          %s463 = sld [smem:[#allocation5 + $0x39]]
          %v464 = vstv %s463
          %v465 = vmul.f32 %v464, %v292
          %467 = vrot.lane.b32.xlu0 %v465, 112
          %v468 = vpop.permute.xlu0 %467
          %v469 = vrot.slane %v468, 2
          %v470 = vsel %vm308, %v468, %v469
          %v472 = vadd.f32 %v452, %v470
          %s473 = sld [smem:[#allocation5 + $0xf]]
          %v474 = vstv %s473
          %v475 = vmul.f32 %v474, %v292
          %477 = vrot.lane.b32.xlu0 %v475, 96
          %v478 = vpop.permute.xlu0 %477
          %v479 = vrot.slane %v478, 2
          %v480 = vsel %vm329, %v478, %v479
          %v482 = vadd.f32 %v462, %v480
          %s483 = sld [smem:[#allocation5 + $0x40]]
          %v484 = vstv %s483
          %v485 = vmul.f32 %v484, %v292
          %487 = vrot.lane.b32.xlu0 %v485, 96
          %v488 = vpop.permute.xlu0 %487
          %v489 = vrot.slane %v488, 2
          %v490 = vsel %vm329, %v488, %v489
          %v492 = vadd.f32 %v472, %v490
          %s493 = sld [smem:[#allocation5 + $0x16]]
          %v494 = vstv %s493
          %v495 = vmul.f32 %v494, %v292
          %497 = vrot.lane.b32.xlu0 %v495, 80
          %v498 = vpop.permute.xlu0 %497
          %v499 = vrot.slane %v498, 2
          %v500 = vsel %vm350, %v498, %v499
          %v502 = vadd.f32 %v482, %v500
          %s503 = sld [smem:[#allocation5 + $0x47]]
          %v504 = vstv %s503
          %v505 = vmul.f32 %v504, %v292
          %507 = vrot.lane.b32.xlu0 %v505, 80
          %v508 = vpop.permute.xlu0 %507
          %v509 = vrot.slane %v508, 2
          %v510 = vsel %vm350, %v508, %v509
          %v512 = vadd.f32 %v492, %v510
          %s513 = sld [smem:[#allocation5 + $0x1d]]
          %v514 = vstv %s513
          %v515 = vmul.f32 %v514, %v364
          %517 = vrot.lane.b32.xlu0 %v515, 64
          %v518 = vpop.permute.xlu0 %517
          %v519 = vrot.slane %v518, 6
          %v520 = vsel %vm372, %v519, %v518
          %v522 = vadd.f32 %v502, %v520
          %s523 = sld [smem:[#allocation5 + $0x4e]]
          %v524 = vstv %s523
          %v525 = vmul.f32 %v524, %v364
          %527 = vrot.lane.b32.xlu0 %v525, 64
          %v528 = vpop.permute.xlu0 %527
          %v529 = vrot.slane %v528, 6
          %v530 = vsel %vm372, %v529, %v528
          %v532 = vadd.f32 %v512, %v530
          %s533 = sld [smem:[#allocation5 + $0x24]]
          %v534 = vstv %s533
          %v535 = vmul.f32 %v534, %v364
          %537 = vrot.lane.b32.xlu0 %v535, 48
          %v538 = vpop.permute.xlu0 %537
          %v539 = vrot.slane %v538, 6
          %v540 = vsel %vm393, %v539, %v538
          %v542 = vadd.f32 %v522, %v540
          %s543 = sld [smem:[#allocation5 + $0x55]]
          %v544 = vstv %s543
          %v545 = vmul.f32 %v544, %v364
          %547 = vrot.lane.b32.xlu0 %v545, 48
          %v548 = vpop.permute.xlu0 %547
          %v549 = vrot.slane %v548, 6
          %v550 = vsel %vm393, %v549, %v548
          %v552 = vadd.f32 %v532, %v550
          %s553 = sld [smem:[#allocation5 + $0x2b]]
          %v554 = vstv %s553
          %v555 = vmul.f32 %v554, %v364
          %557 = vrot.lane.b32.xlu0 %v555, 32
          %v558 = vpop.permute.xlu0 %557
          %v559 = vrot.slane %v558, 6
          %v560 = vsel %vm414, %v559, %v558
          %v562 = vadd.f32 %v542, %v560
          %s563 = sld [smem:[#allocation5 + $0x5c]]
          %v564 = vstv %s563
          %v565 = vmul.f32 %v564, %v364
          %567 = vrot.lane.b32.xlu0 %v565, 32
          %v568 = vpop.permute.xlu0 %567
          %v569 = vrot.slane %v568, 6
          %v570 = vsel %vm414, %v569, %v568
          %v572 = vadd.f32 %v552, %v570
          %s573 = scalar_lea.vmem %s1, 1
          %v574 = vld [vmem:[%s573] ss:$8 sm:$0x3]
          %v576 = vperm.slane %v574, 0
          %v577 = vperm.slane %v574, 1
          %v578 = vrot.slane %v577, 6
          %v579 = vsel %vm433, %v576, %v578
          %580 = vrot.lane.b32.xlu0 %v579, 78
          %v581 = vpop.permute.xlu0 %580
          %v582 = vrot.slane %v581, 6
          %vm583 = vcmask 637952
          %v584 = vsel %vm583, %v582, %v581
          %v586 = vmul.f32 %v562, %v584
          %588 = vrot.lane.b32.xlu0 %v586, 127
          %v589 = vpop.permute.xlu0 %588
          %v590 = vrot.slane %v589, 2
          %vm591 = vcmask 1039360
          %v592 = vsel %vm591, %v589, %v590
          %v594 = vadd.f32 %v442, %v592
          %v595 = vmul.f32 %v572, %v584
          %597 = vrot.lane.b32.xlu0 %v595, 127
          %v598 = vpop.permute.xlu0 %597
          %v599 = vrot.slane %v598, 2
          %v600 = vsel %vm591, %v598, %v599
          %v602 = vadd.f32 %v444, %v600
          %s603 = sld [smem:[#allocation5 + $0x2]]
          %v604 = vstv %s603
          %v605 = vmul.f32 %v604, %v292
          %v606 = vadd.f32 %v605, 0.0
          %s607 = sld [smem:[#allocation5 + $0x33]]
          %v608 = vstv %s607
          %v609 = vmul.f32 %v608, %v292
          %v610 = vadd.f32 %v609, 0.0
          %s611 = sld [smem:[#allocation5 + $0x9]]
          %v612 = vstv %s611
          %v613 = vmul.f32 %v612, %v292
          %615 = vrot.lane.b32.xlu0 %v613, 112
          %v616 = vpop.permute.xlu0 %615
          %v617 = vrot.slane %v616, 2
          %v618 = vsel %vm308, %v616, %v617
          %v620 = vadd.f32 %v606, %v618
          %s621 = sld [smem:[#allocation5 + $0x3a]]
          %v622 = vstv %s621
          %v623 = vmul.f32 %v622, %v292
          %625 = vrot.lane.b32.xlu0 %v623, 112
          %v626 = vpop.permute.xlu0 %625
          %v627 = vrot.slane %v626, 2
          %v628 = vsel %vm308, %v626, %v627
          %v630 = vadd.f32 %v610, %v628
          %s631 = sld [smem:[#allocation5 + $0x10]]
          %v632 = vstv %s631
          %v633 = vmul.f32 %v632, %v292
          %635 = vrot.lane.b32.xlu0 %v633, 96
          %v636 = vpop.permute.xlu0 %635
          %v637 = vrot.slane %v636, 2
          %v638 = vsel %vm329, %v636, %v637
          %v640 = vadd.f32 %v620, %v638
          %s641 = sld [smem:[#allocation5 + $0x41]]
          %v642 = vstv %s641
          %v643 = vmul.f32 %v642, %v292
          %645 = vrot.lane.b32.xlu0 %v643, 96
          %v646 = vpop.permute.xlu0 %645
          %v647 = vrot.slane %v646, 2
          %v648 = vsel %vm329, %v646, %v647
          %v650 = vadd.f32 %v630, %v648
          %s651 = sld [smem:[#allocation5 + $0x17]]
          %v652 = vstv %s651
          %v653 = vmul.f32 %v652, %v292
          %655 = vrot.lane.b32.xlu0 %v653, 80
          %v656 = vpop.permute.xlu0 %655
          %v657 = vrot.slane %v656, 2
          %v658 = vsel %vm350, %v656, %v657
          %v660 = vadd.f32 %v640, %v658
          %s661 = sld [smem:[#allocation5 + $0x48]]
          %v662 = vstv %s661
          %v663 = vmul.f32 %v662, %v292
          %665 = vrot.lane.b32.xlu0 %v663, 80
          %v666 = vpop.permute.xlu0 %665
          %v667 = vrot.slane %v666, 2
          %v668 = vsel %vm350, %v666, %v667
          %v670 = vadd.f32 %v650, %v668
          %s671 = sld [smem:[#allocation5 + $0x1e]]
          %v672 = vstv %s671
          %v673 = vmul.f32 %v672, %v364
          %675 = vrot.lane.b32.xlu0 %v673, 64
          %v676 = vpop.permute.xlu0 %675
          %v677 = vrot.slane %v676, 6
          %v678 = vsel %vm372, %v677, %v676
          %v680 = vadd.f32 %v660, %v678
          %s681 = sld [smem:[#allocation5 + $0x4f]]
          %v682 = vstv %s681
          %v683 = vmul.f32 %v682, %v364
          %685 = vrot.lane.b32.xlu0 %v683, 64
          %v686 = vpop.permute.xlu0 %685
          %v687 = vrot.slane %v686, 6
          %v688 = vsel %vm372, %v687, %v686
          %v690 = vadd.f32 %v670, %v688
          %s691 = sld [smem:[#allocation5 + $0x25]]
          %v692 = vstv %s691
          %v693 = vmul.f32 %v692, %v364
          %695 = vrot.lane.b32.xlu0 %v693, 48
          %v696 = vpop.permute.xlu0 %695
          %v697 = vrot.slane %v696, 6
          %v698 = vsel %vm393, %v697, %v696
          %v700 = vadd.f32 %v680, %v698
          %s701 = sld [smem:[#allocation5 + $0x56]]
          %v702 = vstv %s701
          %v703 = vmul.f32 %v702, %v364
          %705 = vrot.lane.b32.xlu0 %v703, 48
          %v706 = vpop.permute.xlu0 %705
          %v707 = vrot.slane %v706, 6
          %v708 = vsel %vm393, %v707, %v706
          %v710 = vadd.f32 %v690, %v708
          %s711 = sld [smem:[#allocation5 + $0x2c]]
          %v712 = vstv %s711
          %v713 = vmul.f32 %v712, %v364
          %715 = vrot.lane.b32.xlu0 %v713, 32
          %v716 = vpop.permute.xlu0 %715
          %v717 = vrot.slane %v716, 6
          %v718 = vsel %vm414, %v717, %v716
          %v720 = vadd.f32 %v700, %v718
          %s721 = sld [smem:[#allocation5 + $0x5d]]
          %v722 = vstv %s721
          %v723 = vmul.f32 %v722, %v364
          %725 = vrot.lane.b32.xlu0 %v723, 32
          %v726 = vpop.permute.xlu0 %725
          %v727 = vrot.slane %v726, 6
          %v728 = vsel %vm414, %v727, %v726
          %v730 = vadd.f32 %v710, %v728
          %s731 = scalar_lea.vmem %s1, 2
          %v732 = vld [vmem:[%s731] ss:$8 sm:$0x3]
          %v734 = vperm.slane %v732, 0
          %v735 = vperm.slane %v732, 1
          %v736 = vrot.slane %v735, 6
          %v737 = vsel %vm433, %v734, %v736
          %738 = vrot.lane.b32.xlu0 %v737, 79
          %v739 = vpop.permute.xlu0 %738
          %v740 = vrot.slane %v739, 6
          %vm741 = vcmask 646144
          %v742 = vsel %vm741, %v740, %v739
          %v744 = vmul.f32 %v720, %v742
          %746 = vrot.lane.b32.xlu0 %v744, 126
          %v747 = vpop.permute.xlu0 %746
          %v748 = vrot.slane %v747, 2
          %vm749 = vcmask 1031168
          %v750 = vsel %vm749, %v747, %v748
          %v752 = vadd.f32 %v594, %v750
          %v753 = vmul.f32 %v730, %v742
          %755 = vrot.lane.b32.xlu0 %v753, 126
          %v756 = vpop.permute.xlu0 %755
          %v757 = vrot.slane %v756, 2
          %v758 = vsel %vm749, %v756, %v757
          %v760 = vadd.f32 %v602, %v758
          %s761 = sld [smem:[#allocation5 + $0x3]]
          %v762 = vstv %s761
          %v763 = vmul.f32 %v762, %v292
          %v764 = vadd.f32 %v763, 0.0
          %s765 = sld [smem:[#allocation5 + $0x34]]
          %v766 = vstv %s765
          %v767 = vmul.f32 %v766, %v292
          %v768 = vadd.f32 %v767, 0.0
          %s769 = sld [smem:[#allocation5 + $0xa]]
          %v770 = vstv %s769
          %v771 = vmul.f32 %v770, %v292
          %773 = vrot.lane.b32.xlu0 %v771, 112
          %v774 = vpop.permute.xlu0 %773
          %v775 = vrot.slane %v774, 2
          %v776 = vsel %vm308, %v774, %v775
          %v778 = vadd.f32 %v764, %v776
          %s779 = sld [smem:[#allocation5 + $0x3b]]
          %v780 = vstv %s779
          %v781 = vmul.f32 %v780, %v292
          %783 = vrot.lane.b32.xlu0 %v781, 112
          %v784 = vpop.permute.xlu0 %783
          %v785 = vrot.slane %v784, 2
          %v786 = vsel %vm308, %v784, %v785
          %v788 = vadd.f32 %v768, %v786
          %s789 = sld [smem:[#allocation5 + $0x11]]
          %v790 = vstv %s789
          %v791 = vmul.f32 %v790, %v292
          %793 = vrot.lane.b32.xlu0 %v791, 96
          %v794 = vpop.permute.xlu0 %793
          %v795 = vrot.slane %v794, 2
          %v796 = vsel %vm329, %v794, %v795
          %v798 = vadd.f32 %v778, %v796
          %s799 = sld [smem:[#allocation5 + $0x42]]
          %v800 = vstv %s799
          %v801 = vmul.f32 %v800, %v292
          %803 = vrot.lane.b32.xlu0 %v801, 96
          %v804 = vpop.permute.xlu0 %803
          %v805 = vrot.slane %v804, 2
          %v806 = vsel %vm329, %v804, %v805
          %v808 = vadd.f32 %v788, %v806
          %v809 = vld [vmem:[#allocation4 + $0x2] sm:$0xf]
          %s810 = sld [smem:[#allocation5 + $0x18]]
          %v811 = vstv %s810
          %v812 = vmul.f32 %v811, %v809
          %814 = vrot.lane.b32.xlu0 %v812, 80
          %v815 = vpop.permute.xlu0 %814
          %v816 = vrot.slane %v815, 6
          %v817 = vsel %vm350, %v816, %v815
          %v819 = vadd.f32 %v798, %v817
          %s820 = sld [smem:[#allocation5 + $0x49]]
          %v821 = vstv %s820
          %v822 = vmul.f32 %v821, %v809
          %824 = vrot.lane.b32.xlu0 %v822, 80
          %v825 = vpop.permute.xlu0 %824
          %v826 = vrot.slane %v825, 6
          %v827 = vsel %vm350, %v826, %v825
          %v829 = vadd.f32 %v808, %v827
          %s830 = sld [smem:[#allocation5 + $0x1f]]
          %v831 = vstv %s830
          %v832 = vmul.f32 %v831, %v364
          %834 = vrot.lane.b32.xlu0 %v832, 64
          %v835 = vpop.permute.xlu0 %834
          %v836 = vrot.slane %v835, 6
          %v837 = vsel %vm372, %v836, %v835
          %v839 = vadd.f32 %v819, %v837
          %s840 = sld [smem:[#allocation5 + $0x50]]
          %v841 = vstv %s840
          %v842 = vmul.f32 %v841, %v364
          %844 = vrot.lane.b32.xlu0 %v842, 64
          %v845 = vpop.permute.xlu0 %844
          %v846 = vrot.slane %v845, 6
          %v847 = vsel %vm372, %v846, %v845
          %v849 = vadd.f32 %v829, %v847
          %s850 = sld [smem:[#allocation5 + $0x26]]
          %v851 = vstv %s850
          %v852 = vmul.f32 %v851, %v364
          %854 = vrot.lane.b32.xlu0 %v852, 48
          %v855 = vpop.permute.xlu0 %854
          %v856 = vrot.slane %v855, 6
          %v857 = vsel %vm393, %v856, %v855
          %v859 = vadd.f32 %v839, %v857
          %s860 = sld [smem:[#allocation5 + $0x57]]
          %v861 = vstv %s860
          %v862 = vmul.f32 %v861, %v364
          %864 = vrot.lane.b32.xlu0 %v862, 48
          %v865 = vpop.permute.xlu0 %864
          %v866 = vrot.slane %v865, 6
          %v867 = vsel %vm393, %v866, %v865
          %v869 = vadd.f32 %v849, %v867
          %s870 = sld [smem:[#allocation5 + $0x2d]]
          %v871 = vstv %s870
          %v872 = vmul.f32 %v871, %v364
          %874 = vrot.lane.b32.xlu0 %v872, 32
          %v875 = vpop.permute.xlu0 %874
          %v876 = vrot.slane %v875, 6
          %v877 = vsel %vm414, %v876, %v875
          %v879 = vadd.f32 %v859, %v877
          %s880 = sld [smem:[#allocation5 + $0x5e]]
          %v881 = vstv %s880
          %v882 = vmul.f32 %v881, %v364
          %884 = vrot.lane.b32.xlu0 %v882, 32
          %v885 = vpop.permute.xlu0 %884
          %v886 = vrot.slane %v885, 6
          %v887 = vsel %vm414, %v886, %v885
          %v889 = vadd.f32 %v869, %v887
          %s890 = scalar_lea.vmem %s1, 3
          %v891 = vld [vmem:[%s890] ss:$8 sm:$0x3]
          %v893 = vperm.slane %v891, 0
          %v894 = vperm.slane %v891, 1
          %v895 = vrot.slane %v894, 6
          %v896 = vsel %vm433, %v893, %v895
          %897 = vrot.lane.b32.xlu0 %v896, 80
          %v898 = vpop.permute.xlu0 %897
          %v899 = vrot.slane %v898, 6
          %v900 = vsel %vm350, %v899, %v898
          %v902 = vmul.f32 %v879, %v900
          %904 = vrot.lane.b32.xlu0 %v902, 125
          %v905 = vpop.permute.xlu0 %904
          %v906 = vrot.slane %v905, 2
          %vm907 = vcmask 1022976
          %v908 = vsel %vm907, %v905, %v906
          %v910 = vadd.f32 %v752, %v908
          %v911 = vmul.f32 %v889, %v900
          %913 = vrot.lane.b32.xlu0 %v911, 125
          %v914 = vpop.permute.xlu0 %913
          %v915 = vrot.slane %v914, 2
          %v916 = vsel %vm907, %v914, %v915
          %v918 = vadd.f32 %v760, %v916
          %s919 = sld [smem:[#allocation5 + $0x4]]
          %v920 = vstv %s919
          %v921 = vmul.f32 %v920, %v292
          %v922 = vadd.f32 %v921, 0.0
          %s923 = sld [smem:[#allocation5 + $0x35]]
          %v924 = vstv %s923
          %v925 = vmul.f32 %v924, %v292
          %v926 = vadd.f32 %v925, 0.0
          %s927 = sld [smem:[#allocation5 + $0xb]]
          %v928 = vstv %s927
          %v929 = vmul.f32 %v928, %v292
          %931 = vrot.lane.b32.xlu0 %v929, 112
          %v932 = vpop.permute.xlu0 %931
          %v933 = vrot.slane %v932, 2
          %v934 = vsel %vm308, %v932, %v933
          %v936 = vadd.f32 %v922, %v934
          %s937 = sld [smem:[#allocation5 + $0x3c]]
          %v938 = vstv %s937
          %v939 = vmul.f32 %v938, %v292
          %941 = vrot.lane.b32.xlu0 %v939, 112
          %v942 = vpop.permute.xlu0 %941
          %v943 = vrot.slane %v942, 2
          %v944 = vsel %vm308, %v942, %v943
          %v946 = vadd.f32 %v926, %v944
          %s947 = sld [smem:[#allocation5 + $0x12]]
          %v948 = vstv %s947
          %v949 = vmul.f32 %v948, %v292
          %951 = vrot.lane.b32.xlu0 %v949, 96
          %v952 = vpop.permute.xlu0 %951
          %v953 = vrot.slane %v952, 2
          %v954 = vsel %vm329, %v952, %v953
          %v956 = vadd.f32 %v936, %v954
          %s957 = sld [smem:[#allocation5 + $0x43]]
          %v958 = vstv %s957
          %v959 = vmul.f32 %v958, %v292
          %961 = vrot.lane.b32.xlu0 %v959, 96
          %v962 = vpop.permute.xlu0 %961
          %v963 = vrot.slane %v962, 2
          %v964 = vsel %vm329, %v962, %v963
          %v966 = vadd.f32 %v946, %v964
          %s967 = sld [smem:[#allocation5 + $0x19]]
          %v968 = vstv %s967
          %v969 = vmul.f32 %v968, %v364
          %971 = vrot.lane.b32.xlu0 %v969, 80
          %v972 = vpop.permute.xlu0 %971
          %v973 = vrot.slane %v972, 6
          %v974 = vsel %vm350, %v973, %v972
          %v976 = vadd.f32 %v956, %v974
          %s977 = sld [smem:[#allocation5 + $0x4a]]
          %v978 = vstv %s977
          %v979 = vmul.f32 %v978, %v364
          %981 = vrot.lane.b32.xlu0 %v979, 80
          %v982 = vpop.permute.xlu0 %981
          %v983 = vrot.slane %v982, 6
          %v984 = vsel %vm350, %v983, %v982
          %v986 = vadd.f32 %v966, %v984
          %s987 = sld [smem:[#allocation5 + $0x20]]
          %v988 = vstv %s987
          %v989 = vmul.f32 %v988, %v364
          %991 = vrot.lane.b32.xlu0 %v989, 64
          %v992 = vpop.permute.xlu0 %991
          %v993 = vrot.slane %v992, 6
          %v994 = vsel %vm372, %v993, %v992
          %v996 = vadd.f32 %v976, %v994
          %s997 = sld [smem:[#allocation5 + $0x51]]
          %v998 = vstv %s997
          %v999 = vmul.f32 %v998, %v364
          %1001 = vrot.lane.b32.xlu0 %v999, 64
          %v1002 = vpop.permute.xlu0 %1001
          %v1003 = vrot.slane %v1002, 6
          %v1004 = vsel %vm372, %v1003, %v1002
          %v1006 = vadd.f32 %v986, %v1004
          %s1007 = sld [smem:[#allocation5 + $0x27]]
          %v1008 = vstv %s1007
          %v1009 = vmul.f32 %v1008, %v364
          %1011 = vrot.lane.b32.xlu0 %v1009, 48
          %v1012 = vpop.permute.xlu0 %1011
          %v1013 = vrot.slane %v1012, 6
          %v1014 = vsel %vm393, %v1013, %v1012
          %v1016 = vadd.f32 %v996, %v1014
          %s1017 = sld [smem:[#allocation5 + $0x58]]
          %v1018 = vstv %s1017
          %v1019 = vmul.f32 %v1018, %v364
          %1021 = vrot.lane.b32.xlu0 %v1019, 48
          %v1022 = vpop.permute.xlu0 %1021
          %v1023 = vrot.slane %v1022, 6
          %v1024 = vsel %vm393, %v1023, %v1022
          %v1026 = vadd.f32 %v1006, %v1024
          %s1027 = sld [smem:[#allocation5 + $0x2e]]
          %v1028 = vstv %s1027
          %v1029 = vmul.f32 %v1028, %v364
          %1031 = vrot.lane.b32.xlu0 %v1029, 32
          %v1032 = vpop.permute.xlu0 %1031
          %v1033 = vrot.slane %v1032, 6
          %v1034 = vsel %vm414, %v1033, %v1032
          %v1036 = vadd.f32 %v1016, %v1034
          %s1037 = sld [smem:[#allocation5 + $0x5f]]
          %v1038 = vstv %s1037
          %v1039 = vmul.f32 %v1038, %v364
          %1041 = vrot.lane.b32.xlu0 %v1039, 32
          %v1042 = vpop.permute.xlu0 %1041
          %v1043 = vrot.slane %v1042, 6
          %v1044 = vsel %vm414, %v1043, %v1042
          %v1046 = vadd.f32 %v1026, %v1044
          %s1047 = scalar_lea.vmem %s1, 4
          %v1048 = vld [vmem:[%s1047] ss:$8 sm:$0x3]
          %v1050 = vperm.slane %v1048, 0
          %v1051 = vperm.slane %v1048, 1
          %v1052 = vrot.slane %v1051, 6
          %v1053 = vsel %vm433, %v1050, %v1052
          %1054 = vrot.lane.b32.xlu0 %v1053, 81
          %v1055 = vpop.permute.xlu0 %1054
          %v1056 = vrot.slane %v1055, 6
          %vm1057 = vcmask 662528
          %v1058 = vsel %vm1057, %v1056, %v1055
          %v1060 = vmul.f32 %v1036, %v1058
          %1062 = vrot.lane.b32.xlu0 %v1060, 124
          %v1063 = vpop.permute.xlu0 %1062
          %v1064 = vrot.slane %v1063, 2
          %vm1065 = vcmask 1014784
          %v1066 = vsel %vm1065, %v1063, %v1064
          %v1068 = vadd.f32 %v910, %v1066
          %v1069 = vmul.f32 %v1046, %v1058
          %1071 = vrot.lane.b32.xlu0 %v1069, 124
          %v1072 = vpop.permute.xlu0 %1071
          %v1073 = vrot.slane %v1072, 2
          %v1074 = vsel %vm1065, %v1072, %v1073
          %v1076 = vadd.f32 %v918, %v1074
          %s1077 = sld [smem:[#allocation5 + $0x5]]
          %v1078 = vstv %s1077
          %v1079 = vmul.f32 %v1078, %v292
          %v1080 = vadd.f32 %v1079, 0.0
          %s1081 = sld [smem:[#allocation5 + $0x36]]
          %v1082 = vstv %s1081
          %v1083 = vmul.f32 %v1082, %v292
          %v1084 = vadd.f32 %v1083, 0.0
          %s1085 = sld [smem:[#allocation5 + $0xc]]
          %v1086 = vstv %s1085
          %v1087 = vmul.f32 %v1086, %v292
          %1089 = vrot.lane.b32.xlu0 %v1087, 112
          %v1090 = vpop.permute.xlu0 %1089
          %v1091 = vrot.slane %v1090, 2
          %v1092 = vsel %vm308, %v1090, %v1091
          %v1094 = vadd.f32 %v1080, %v1092
          %s1095 = sld [smem:[#allocation5 + $0x3d]]
          %v1096 = vstv %s1095
          %v1097 = vmul.f32 %v1096, %v292
          %1099 = vrot.lane.b32.xlu0 %v1097, 112
          %v1100 = vpop.permute.xlu0 %1099
          %v1101 = vrot.slane %v1100, 2
          %v1102 = vsel %vm308, %v1100, %v1101
          %v1104 = vadd.f32 %v1084, %v1102
          %s1105 = sld [smem:[#allocation5 + $0x13]]
          %v1106 = vstv %s1105
          %v1107 = vmul.f32 %v1106, %v292
          %1109 = vrot.lane.b32.xlu0 %v1107, 96
          %v1110 = vpop.permute.xlu0 %1109
          %v1111 = vrot.slane %v1110, 2
          %v1112 = vsel %vm329, %v1110, %v1111
          %v1114 = vadd.f32 %v1094, %v1112
          %s1115 = sld [smem:[#allocation5 + $0x44]]
          %v1116 = vstv %s1115
          %v1117 = vmul.f32 %v1116, %v292
          %1119 = vrot.lane.b32.xlu0 %v1117, 96
          %v1120 = vpop.permute.xlu0 %1119
          %v1121 = vrot.slane %v1120, 2
          %v1122 = vsel %vm329, %v1120, %v1121
          %v1124 = vadd.f32 %v1104, %v1122
          %s1125 = sld [smem:[#allocation5 + $0x1a]]
          %v1126 = vstv %s1125
          %v1127 = vmul.f32 %v1126, %v364
          %1129 = vrot.lane.b32.xlu0 %v1127, 80
          %v1130 = vpop.permute.xlu0 %1129
          %v1131 = vrot.slane %v1130, 6
          %v1132 = vsel %vm350, %v1131, %v1130
          %v1134 = vadd.f32 %v1114, %v1132
          %s1135 = sld [smem:[#allocation5 + $0x4b]]
          %v1136 = vstv %s1135
          %v1137 = vmul.f32 %v1136, %v364
          %1139 = vrot.lane.b32.xlu0 %v1137, 80
          %v1140 = vpop.permute.xlu0 %1139
          %v1141 = vrot.slane %v1140, 6
          %v1142 = vsel %vm350, %v1141, %v1140
          %v1144 = vadd.f32 %v1124, %v1142
          %s1145 = sld [smem:[#allocation5 + $0x21]]
          %v1146 = vstv %s1145
          %v1147 = vmul.f32 %v1146, %v364
          %1149 = vrot.lane.b32.xlu0 %v1147, 64
          %v1150 = vpop.permute.xlu0 %1149
          %v1151 = vrot.slane %v1150, 6
          %v1152 = vsel %vm372, %v1151, %v1150
          %v1154 = vadd.f32 %v1134, %v1152
          %s1155 = sld [smem:[#allocation5 + $0x52]]
          %v1156 = vstv %s1155
          %v1157 = vmul.f32 %v1156, %v364
          %1159 = vrot.lane.b32.xlu0 %v1157, 64
          %v1160 = vpop.permute.xlu0 %1159
          %v1161 = vrot.slane %v1160, 6
          %v1162 = vsel %vm372, %v1161, %v1160
          %v1164 = vadd.f32 %v1144, %v1162
          %s1165 = sld [smem:[#allocation5 + $0x28]]
          %v1166 = vstv %s1165
          %v1167 = vmul.f32 %v1166, %v364
          %1169 = vrot.lane.b32.xlu0 %v1167, 48
          %v1170 = vpop.permute.xlu0 %1169
          %v1171 = vrot.slane %v1170, 6
          %v1172 = vsel %vm393, %v1171, %v1170
          %v1174 = vadd.f32 %v1154, %v1172
          %s1175 = sld [smem:[#allocation5 + $0x59]]
          %v1176 = vstv %s1175
          %v1177 = vmul.f32 %v1176, %v364
          %1179 = vrot.lane.b32.xlu0 %v1177, 48
          %v1180 = vpop.permute.xlu0 %1179
          %v1181 = vrot.slane %v1180, 6
          %v1182 = vsel %vm393, %v1181, %v1180
          %v1184 = vadd.f32 %v1164, %v1182
          %s1185 = sld [smem:[#allocation5 + $0x2f]]
          %v1186 = vstv %s1185
          %v1187 = vmul.f32 %v1186, %v364
          %1189 = vrot.lane.b32.xlu0 %v1187, 32
          %v1190 = vpop.permute.xlu0 %1189
          %v1191 = vrot.slane %v1190, 6
          %v1192 = vsel %vm414, %v1191, %v1190
          %v1194 = vadd.f32 %v1174, %v1192
          %s1195 = sld [smem:[#allocation5 + $0x60]]
          %v1196 = vstv %s1195
          %v1197 = vmul.f32 %v1196, %v364
          %1199 = vrot.lane.b32.xlu0 %v1197, 32
          %v1200 = vpop.permute.xlu0 %1199
          %v1201 = vrot.slane %v1200, 6
          %v1202 = vsel %vm414, %v1201, %v1200
          %v1204 = vadd.f32 %v1184, %v1202
          %s1205 = scalar_lea.vmem %s1, 5
          %v1206 = vld [vmem:[%s1205] ss:$8 sm:$0x3]
          %v1208 = vperm.slane %v1206, 0
          %v1209 = vperm.slane %v1206, 1
          %v1210 = vrot.slane %v1209, 6
          %v1211 = vsel %vm433, %v1208, %v1210
          %1212 = vrot.lane.b32.xlu0 %v1211, 82
          %v1213 = vpop.permute.xlu0 %1212
          %v1214 = vrot.slane %v1213, 6
          %vm1215 = vcmask 670720
          %v1216 = vsel %vm1215, %v1214, %v1213
          %v1218 = vmul.f32 %v1194, %v1216
          %1220 = vrot.lane.b32.xlu0 %v1218, 123
          %v1221 = vpop.permute.xlu0 %1220
          %v1222 = vrot.slane %v1221, 2
          %vm1223 = vcmask 1006592
          %v1224 = vsel %vm1223, %v1221, %v1222
          %v1226 = vadd.f32 %v1068, %v1224
          %v1227 = vmul.f32 %v1204, %v1216
          %1229 = vrot.lane.b32.xlu0 %v1227, 123
          %v1230 = vpop.permute.xlu0 %1229
          %v1231 = vrot.slane %v1230, 2
          %v1232 = vsel %vm1223, %v1230, %v1231
          %v1234 = vadd.f32 %v1076, %v1232
          %s1235 = sld [smem:[#allocation5 + $0x6]]
          %v1236 = vstv %s1235
          %v1237 = vmul.f32 %v1236, %v292
          %v1238 = vadd.f32 %v1237, 0.0
          %s1239 = sld [smem:[#allocation5 + $0x37]]
          %v1240 = vstv %s1239
          %v1241 = vmul.f32 %v1240, %v292
          %v1242 = vadd.f32 %v1241, 0.0
          %s1243 = sld [smem:[#allocation5 + $0xd]]
          %v1244 = vstv %s1243
          %v1245 = vmul.f32 %v1244, %v292
          %1247 = vrot.lane.b32.xlu0 %v1245, 112
          %v1248 = vpop.permute.xlu0 %1247
          %v1249 = vrot.slane %v1248, 2
          %v1250 = vsel %vm308, %v1248, %v1249
          %v1252 = vadd.f32 %v1238, %v1250
          %s1253 = sld [smem:[#allocation5 + $0x3e]]
          %v1254 = vstv %s1253
          %v1255 = vmul.f32 %v1254, %v292
          %1257 = vrot.lane.b32.xlu0 %v1255, 112
          %v1258 = vpop.permute.xlu0 %1257
          %v1259 = vrot.slane %v1258, 2
          %v1260 = vsel %vm308, %v1258, %v1259
          %v1262 = vadd.f32 %v1242, %v1260
          %s1263 = sld [smem:[#allocation5 + $0x14]]
          %v1264 = vstv %s1263
          %v1265 = vmul.f32 %v1264, %v292
          %1267 = vrot.lane.b32.xlu0 %v1265, 96
          %v1268 = vpop.permute.xlu0 %1267
          %v1269 = vrot.slane %v1268, 2
          %v1270 = vsel %vm329, %v1268, %v1269
          %v1272 = vadd.f32 %v1252, %v1270
          %s1273 = sld [smem:[#allocation5 + $0x45]]
          %v1274 = vstv %s1273
          %v1275 = vmul.f32 %v1274, %v292
          %1277 = vrot.lane.b32.xlu0 %v1275, 96
          %v1278 = vpop.permute.xlu0 %1277
          %v1279 = vrot.slane %v1278, 2
          %v1280 = vsel %vm329, %v1278, %v1279
          %v1282 = vadd.f32 %v1262, %v1280
          %s1283 = sld [smem:[#allocation5 + $0x1b]]
          %v1284 = vstv %s1283
          %v1285 = vmul.f32 %v1284, %v364
          %1287 = vrot.lane.b32.xlu0 %v1285, 80
          %v1288 = vpop.permute.xlu0 %1287
          %v1289 = vrot.slane %v1288, 6
          %v1290 = vsel %vm350, %v1289, %v1288
          %v1292 = vadd.f32 %v1272, %v1290
          %s1293 = sld [smem:[#allocation5 + $0x4c]]
          %v1294 = vstv %s1293
          %v1295 = vmul.f32 %v1294, %v364
          %1297 = vrot.lane.b32.xlu0 %v1295, 80
          %v1298 = vpop.permute.xlu0 %1297
          %v1299 = vrot.slane %v1298, 6
          %v1300 = vsel %vm350, %v1299, %v1298
          %v1302 = vadd.f32 %v1282, %v1300
          %s1303 = sld [smem:[#allocation5 + $0x22]]
          %v1304 = vstv %s1303
          %v1305 = vmul.f32 %v1304, %v364
          %1307 = vrot.lane.b32.xlu0 %v1305, 64
          %v1308 = vpop.permute.xlu0 %1307
          %v1309 = vrot.slane %v1308, 6
          %v1310 = vsel %vm372, %v1309, %v1308
          %v1312 = vadd.f32 %v1292, %v1310
          %s1313 = sld [smem:[#allocation5 + $0x53]]
          %v1314 = vstv %s1313
          %v1315 = vmul.f32 %v1314, %v364
          %1317 = vrot.lane.b32.xlu0 %v1315, 64
          %v1318 = vpop.permute.xlu0 %1317
          %v1319 = vrot.slane %v1318, 6
          %v1320 = vsel %vm372, %v1319, %v1318
          %v1322 = vadd.f32 %v1302, %v1320
          %s1323 = sld [smem:[#allocation5 + $0x29]]
          %v1324 = vstv %s1323
          %v1325 = vmul.f32 %v1324, %v364
          %1327 = vrot.lane.b32.xlu0 %v1325, 48
          %v1328 = vpop.permute.xlu0 %1327
          %v1329 = vrot.slane %v1328, 6
          %v1330 = vsel %vm393, %v1329, %v1328
          %v1332 = vadd.f32 %v1312, %v1330
          %s1333 = sld [smem:[#allocation5 + $0x5a]]
          %v1334 = vstv %s1333
          %v1335 = vmul.f32 %v1334, %v364
          %1337 = vrot.lane.b32.xlu0 %v1335, 48
          %v1338 = vpop.permute.xlu0 %1337
          %v1339 = vrot.slane %v1338, 6
          %v1340 = vsel %vm393, %v1339, %v1338
          %v1342 = vadd.f32 %v1322, %v1340
          %s1343 = sld [smem:[#allocation5 + $0x30]]
          %v1344 = vstv %s1343
          %v1345 = vmul.f32 %v1344, %v364
          %1347 = vrot.lane.b32.xlu0 %v1345, 32
          %v1348 = vpop.permute.xlu0 %1347
          %v1349 = vrot.slane %v1348, 6
          %v1350 = vsel %vm414, %v1349, %v1348
          %v1352 = vadd.f32 %v1332, %v1350
          %s1353 = sld [smem:[#allocation5 + $0x61]]
          %v1354 = vstv %s1353
          %v1355 = vmul.f32 %v1354, %v364
          %1357 = vrot.lane.b32.xlu0 %v1355, 32
          %v1358 = vpop.permute.xlu0 %1357
          %v1359 = vrot.slane %v1358, 6
          %v1360 = vsel %vm414, %v1359, %v1358
          %v1362 = vadd.f32 %v1342, %v1360
          %s1363 = scalar_lea.vmem %s1, 6
          %v1364 = vld [vmem:[%s1363] ss:$8 sm:$0x3]
          %v1366 = vperm.slane %v1364, 0
          %v1367 = vperm.slane %v1364, 1
          %v1368 = vrot.slane %v1367, 6
          %v1369 = vsel %vm433, %v1366, %v1368
          %1370 = vrot.lane.b32.xlu0 %v1369, 83
          %v1371 = vpop.permute.xlu0 %1370
          %v1372 = vrot.slane %v1371, 6
          %vm1373 = vcmask 678912
          %v1374 = vsel %vm1373, %v1372, %v1371
          %v1376 = vmul.f32 %v1352, %v1374
          %1378 = vrot.lane.b32.xlu0 %v1376, 122
          %v1379 = vpop.permute.xlu0 %1378
          %v1380 = vrot.slane %v1379, 2
          %vm1381 = vcmask 998400
          %v1382 = vsel %vm1381, %v1379, %v1380
          %v1384 = vadd.f32 %v1226, %v1382
          %v1385 = vmul.f32 %v1362, %v1374
          %1387 = vrot.lane.b32.xlu0 %v1385, 122
          %v1388 = vpop.permute.xlu0 %1387
          %v1389 = vrot.slane %v1388, 2
          %v1390 = vsel %vm1381, %v1388, %v1389
          %v1392 = vadd.f32 %v1234, %v1390
          %v1394 = vrot.slane %v1392, 7
          %v1395 = vrot.slane %v1394, 2
          %v1397 = vadd.f32 %v1384, %v1395
          %v1398 = vxor.u32 %v1397, 2147483648
          %v1399 = vmul.f32 %v1398, 1.442695
          %v1400 = vpow.pop %v1399
          %v1401 = vadd.f32 %v1400, 1.0
          %v1402 = vrcp.pop %v1401
          %v1403 = vmul.f32 %v1401, %v1402
          %v1404 = vsub.f32 1.0, %v1403
          %v1405 = vmul.f32 %v1402, %v1404
          %v1406 = vadd.f32 %v1402, %v1405
          %vm1407 = vweird.f32 %v1401
          %vm1408 = vweird.f32 %v1402
          %vm1409 = vmor %vm1407, %vm1408
          %v1410 = vsel %vm1409, %v1402, %v1406
          %v1411 = vand.u32 2147483647, %v1401
          %vm1412 = vcmp.eq.f32.partialorder %v1411, 8.507059e+37
          %v1413 = vand.u32 %v1401, 2147483648
          %v1414 = vor.u32 1.1754944e-38, %v1413
          %v1415 = vsel %vm1412, %v1414, %v1410
          %v1416 = vmul.f32 1.0, %v1415
          %v1418 = vrot.slane %v1416, 1
          %v1419 = vrot.slane %v1416, 2
          %v1420 = vrot.slane %v1416, 3
          %v1421 = vsel %vm245, %v1416, %v1418
          %vm1422 = vcmask 1042434
          %v1423 = vsel %vm1422, %v1419, %v1420
          %v1424 = vsel %vm433, %v1421, %v1423
          %1425 = vrot.lane.b32.xlu0 %v1424, 51
          %v1426 = vpop.permute.xlu0 %1425
          %v1427 = vrot.slane %v1426, 1
          %vm1428 = vcmask 416768
          %v1429 = vsel %vm1428, %v1426, %v1427
          %1431 = vst.msk [vmem:[%s208] sm:$0x3] %vm252, %v1429
        $region44: #{spatial_attention.1} parent=31 // pred_fallthru
          _
        %p1432 = scmp.lt.s32.totalorder %s19, 1
        %s1433 = scalar_select %p1432, %s19, 1
        %s1434 = smul.addr %s1433, 2
        %s1435 = scalar_lea.vmem %s3, %s1434
        // Predicated region
        $region45: #{spatial_attention.1} parent=31 // pred_check
          %p1436 = pneg %p115
        $region46: #{spatial_attention.1} parent=31 // pred_check_branch
          %1438 = sbr.rel (%p1436) target = $region48
        $region47: #{spatial_attention.1} parent=31 // pred_region
          _
        $region48: #{spatial_attention.1} parent=31 // pred_fallthru
          _
      $region32: #{spatial_attention.1} parent=5 // pred_fallthru
        _
      %p1439 = scmp.le.s32.totalorder 2, %s10
      // Predicated region
      $region49: #{spatial_attention.1} parent=5 // pred_check
        %p1440 = pneg %p1439
      $region50: #{spatial_attention.1} parent=5 // pred_check_branch
        %1442 = sbr.rel (%p1440) target = $region52
      $region51: #{spatial_attention.1} parent=5 // pred_region
        %s1443 = ssub.s32 %s10, 2
        // Predicated region
        $region53: #{spatial_attention.1} parent=51 // pred_check
          %p1444 = pneg %p121
        $region54: #{spatial_attention.1} parent=51 // pred_check_branch
          %1446 = sbr.rel (%p1444) target = $region56
        $region55: #{spatial_attention.1} parent=51 // pred_region
          %p1447 = scmp.lt.s32.totalorder %s21, 1
          %s1448 = scalar_select %p1447, %s21, 1
          %s1449 = smul.addr %s1448, 2
          %s1450 = scalar_lea.vmem %s3, %s1449
        $region56: #{spatial_attention.1} parent=51 // pred_fallthru
          _
      $region52: #{spatial_attention.1} parent=5 // pred_fallthru
        _
    $region6: #{spatial_attention.1} parent=1 // loop_footer
      %s14 = sadd.s32 1, %s10
    $region7: #{spatial_attention.1} parent=1 // loop_footer_branch
      %9 = sbr.rel target = $region3
    $region8: #{spatial_attention.1} parent=1 // loop_exit
      _
    %1451 = vsyncpa [#allocation6], 1
    %s1452 = scalar_lea.sflag [#allocation6], 1
    %1453 = vsyncpa %s1452, 1

</llo_original>
